<compile_context>
chip_gen: v7x
topology: tpu7x:2x2x1
jax: 0.10.0
libtpu: 0.0.40
codegen_flags: <defaults>
</compile_context>

<pallas_src>
import functools

import jax
import jax.numpy as jnp
import numpy as np
from jax import lax
from jax.experimental import pallas as pl
from jax.experimental.pallas import tpu as pltpu


def _round_up(v, m):
    return (v + m - 1) // m * m


def _gru_kernel(x_ref, h0_ref, wih_ref, whh_ref, bgi_ref, bhhn_ref, out_ref,
                gi_ref, *, T, Tc, Bp, Hp):
    """One time-chunk of the GRU recurrence.

    Grid axis 0 iterates time chunks ("arbitrary"); the hidden state is carried
    in out_ref, which stays resident in VMEM across the whole grid.

    x_ref    : (Tc*Bp, Ip)   bf16 time-major chunk of the packed input
    h0_ref   : (Bp, Hp)      f32 initial hidden state
    wih_ref  : (Ip, 3*Hp)    bf16 W_ih^T, gate layout [r | z | n]
    whh_ref  : (Hp, 3*Hp)    f32 W_hh^T, same gate layout
    bgi_ref  : (1, 3*Hp)     f32 folded bias: b_ih + [b_hh_r, b_hh_z, 0]
    bhhn_ref : (1, Hp)       f32 b_hh for the n gate
    out_ref  : (Bp, Hp)      f32 hidden-state carry / final output
    gi_ref   : (Tc*Bp, 3*Hp) f32 scratch: per-chunk input projection
    """
    c = pl.program_id(0)

    @pl.when(c == 0)
    def _():
        out_ref[...] = h0_ref[...]

    # Per-chunk input projection for all Tc timesteps: one MXU matmul, bf16
    # operands, f32 accumulate.  b_ih (all gates) + b_hh (r,z gates) are folded
    # in here, off the serial recurrence path.
    gi_ref[...] = (
        jnp.dot(x_ref[...], wih_ref[...], preferred_element_type=jnp.float32)
        + bgi_ref[...]
    )

    # Hoisted broadcast (JAX does not CSE broadcast_in_dim inside the loop).
    bhh_n = jnp.broadcast_to(bhhn_ref[...], (Bp, Hp))

    def step(k, h):
        row = pl.multiple_of(k * Bp, Bp)
        gi = gi_ref[pl.ds(row, Bp), :]                          # (Bp, 3*Hp)
        # TODO(synk): hold W_hh resident in MXU weight registers via
        # pltpu.matmul_push_rhs / matmul_acc_lhs (3*Hp spans >1 MXU tile, needs
        # split staging); jnp.dot re-reads the RHS from VMEM each step instead.
        gh = jnp.dot(h, whh_ref[...], preferred_element_type=jnp.float32)

        # Single fused sigmoid over the contiguous r|z lanes, then tile-aligned
        # lane slices (each gate is a multiple of 128 lanes).
        rz = jax.nn.sigmoid(gi[:, :2 * Hp] + gh[:, :2 * Hp])
        r, z = rz[:, :Hp], rz[:, Hp:]
        n = jnp.tanh(gi[:, 2 * Hp:] + r * (gh[:, 2 * Hp:] + bhh_n))
        h_new = (1.0 - z) * n + z * h

        if T % Tc != 0:
            # Only traced when the time axis was padded: padded steps keep h.
            m = (c * Tc + k < T).astype(jnp.float32)
            h_new = m * h_new + (1.0 - m) * h
        return h_new

    out_ref[...] = lax.fori_loop(0, Tc, step, out_ref[...], unroll=min(Tc, 8))


def recurrent_encoder_forward(x, hidden_state, w_ih, w_hh, b_ih, b_hh, *,
                              time_chunk=128):
    """Equivalent of RecurrentEncoder.forward: returns h_n of shape (1, B, H)."""
    B, T, I = x.shape
    H = hidden_state.shape[-1]

    Bp = _round_up(B, 8)          # one sublane tile
    Hp = _round_up(H, 128)        # each gate is a (multiple of a) lane tile
    Ip = _round_up(I, 128)

    Tc = min(time_chunk, _round_up(T, 8))   # timesteps per grid step
    n_chunks = pl.cdiv(T, Tc)
    T_pad = n_chunks * Tc

    f32, bf16 = jnp.float32, jnp.bfloat16

    # Time-major, batch/feature padded input in bf16 (pad fused into the cast).
    # Rows are time-major so a (Tc*Bp, Ip) block along dim 0 is one time chunk.
    x_tbi = jnp.transpose(x, (1, 0, 2)).astype(bf16)               # (T, B, I)
    x2d = (jnp.zeros((T_pad, Bp, Ip), bf16)
           .at[:T, :B, :I].set(x_tbi)
           .reshape(T_pad * Bp, Ip))

    h0 = jnp.zeros((Bp, Hp), f32).at[:B, :H].set(hidden_state[0].astype(f32))

    def pad_w(w, in_dim, in_pad):
        # torch layout (3H, in_dim), gate order r,z,n -> (in_pad, 3*Hp); each
        # gate padded to Hp lanes so in-kernel gate slices are tile-aligned.
        w3 = w.astype(f32).reshape(3, H, in_dim)
        wp = jnp.zeros((3, Hp, in_pad), f32).at[:, :H, :in_dim].set(w3)
        return jnp.transpose(wp, (2, 0, 1)).reshape(in_pad, 3 * Hp)

    def pad_b(b):
        b3 = b.astype(f32).reshape(3, H)
        return jnp.zeros((3, Hp), f32).at[:, :H].set(b3)

    wih_t = pad_w(w_ih, I, Ip).astype(bf16)     # (Ip, 3Hp) bf16 MXU operand
    whh_t = pad_w(w_hh, H, Hp)                  # (Hp, 3Hp) f32 (serial path)

    bih3 = pad_b(b_ih)                          # (3, Hp)
    bhh3 = pad_b(b_hh)                          # (3, Hp)
    # r,z biases folded into gi; the n gate keeps b_ih in gi while b_hh_n is
    # applied per step inside r * (W_hn h + b_hn), matching torch.nn.GRU.
    bias_gi = (bih3 + bhh3.at[2].set(0.0)).reshape(1, 3 * Hp)
    bhh_n = bhh3[2].reshape(1, Hp)

    kernel = functools.partial(_gru_kernel, T=T, Tc=Tc, Bp=Bp, Hp=Hp)

    # Explicit VMEM budget so the same kernel stays inside v7x's 64 MiB.
    vmem_bytes = (
        2 * Tc * Bp * Ip * 2          # double-buffered bf16 x chunk
        + Tc * Bp * 3 * Hp * 4        # gi scratch
        + Ip * 3 * Hp * 2             # W_ih^T (bf16)
        + Hp * 3 * Hp * 4             # W_hh^T (f32)
        + 3 * Bp * Hp * 4             # h0 + out carry + slack
        + 4 * Hp * 4                  # biases
    )
    vmem_limit = int(min(max(2 * vmem_bytes + (4 << 20), 16 << 20), 64 << 20))

    h_n = pl.pallas_call(
        kernel,
        out_shape=jax.ShapeDtypeStruct((Bp, Hp), f32),
        grid_spec=pltpu.PrefetchScalarGridSpec(
            num_scalar_prefetch=0,
            grid=(n_chunks,),                                      # time chunks
            in_specs=[
                pl.BlockSpec((Tc * Bp, Ip), lambda c: (c, 0)),     # x chunk
                pl.BlockSpec((Bp, Hp), lambda c: (0, 0)),          # h0
                pl.BlockSpec((Ip, 3 * Hp), lambda c: (0, 0)),      # W_ih^T
                pl.BlockSpec((Hp, 3 * Hp), lambda c: (0, 0)),      # W_hh^T
                pl.BlockSpec((1, 3 * Hp), lambda c: (0, 0)),       # folded bias
                pl.BlockSpec((1, Hp), lambda c: (0, 0)),           # b_hh (n)
            ],
            out_specs=pl.BlockSpec((Bp, Hp), lambda c: (0, 0)),    # resident h
            scratch_shapes=[pltpu.VMEM((Tc * Bp, 3 * Hp), jnp.float32)],
        ),
        compiler_params=pltpu.CompilerParams(
            dimension_semantics=("arbitrary",),   # serial carry over time
            vmem_limit_bytes=vmem_limit,
        ),
    )(x2d, h0, wih_t, whh_t, bias_gi, bhh_n)

    # TODO(synk): if the real workload has many independent sequences, add a
    # leading "parallel" batch-chunk grid axis to feed v7x's second TensorCore.
    return h_n[:B, :H][None]                                       # (1, B, H)


def gru_reference(x, h0, w_ih, w_hh, b_ih, b_hh):
    """Pure-JAX reference mirroring torch.nn.GRU (gate order r, z, n)."""
    H = h0.shape[-1]
    h = h0[0]
    for t in range(x.shape[1]):
        x_t = x[:, t, :]
        gi = x_t @ w_ih.T + b_ih
        gh = h @ w_hh.T + b_hh
        i_r, i_z, i_n = gi[:, :H], gi[:, H:2 * H], gi[:, 2 * H:]
        h_r, h_z, h_n = gh[:, :H], gh[:, H:2 * H], gh[:, 2 * H:]
        r = jax.nn.sigmoid(i_r + h_r)
        z = jax.nn.sigmoid(i_z + h_z)
        n = jnp.tanh(i_n + r * h_n)
        h = (1.0 - z) * n + z * h
    return h[None]


if __name__ == "__main__":
    # Small shapes consistent with the module's forward: batch=2, seq=8,
    # input_size=4, hidden_size=32.
    B, T, I, H = 2, 8, 4, 32

    key = jax.random.PRNGKey(0)
    kx, kwi, kwh, kbi, kbh = jax.random.split(key, 5)

    x = jax.random.normal(kx, (B, T, I), dtype=jnp.float32)
    hidden_state = jnp.zeros((1, B, H), dtype=jnp.float32)   # init_hidden_states(bsize)

    # PyTorch-style uniform(-1/sqrt(H), 1/sqrt(H)) parameter init.
    bound = 1.0 / np.sqrt(H)
    w_ih = jax.random.uniform(kwi, (3 * H, I), minval=-bound, maxval=bound, dtype=jnp.float32)
    w_hh = jax.random.uniform(kwh, (3 * H, H), minval=-bound, maxval=bound, dtype=jnp.float32)
    b_ih = jax.random.uniform(kbi, (3 * H,), minval=-bound, maxval=bound, dtype=jnp.float32)
    b_hh = jax.random.uniform(kbh, (3 * H,), minval=-bound, maxval=bound, dtype=jnp.float32)

    h_n = recurrent_encoder_forward(x, hidden_state, w_ih, w_hh, b_ih, b_hh)
    jax.block_until_ready(h_n)

    h_ref = gru_reference(x, hidden_state, w_ih, w_hh, b_ih, b_hh)
    # bf16 matmul operands (f32 accumulate / f32 gate math) -> loosened tolerance.
    np.testing.assert_allclose(np.asarray(h_n), np.asarray(h_ref), rtol=2e-2, atol=2e-2)

    assert h_n.shape == (1, B, H)
    print("KERNEL_OK")
</pallas_src>

<mosaic_0001>
module attributes {stable_mosaic.version = 11 : i64} {
  func.func @_gru_kernel(%arg0: i32, %arg1: memref<64x128xbf16, #tpu.memory_space<vmem>>, %arg2: memref<8x128xf32, #tpu.memory_space<vmem>>, %arg3: memref<128x384xbf16, #tpu.memory_space<vmem>>, %arg4: memref<128x384xf32, #tpu.memory_space<vmem>>, %arg5: memref<1x384xf32, #tpu.memory_space<vmem>>, %arg6: memref<1x128xf32, #tpu.memory_space<vmem>>, %arg7: memref<8x128xf32, #tpu.memory_space<vmem>>, %arg8: memref<64x384xf32, #tpu.memory_space<vmem>>) attributes {dimension_semantics = [#tpu.dimension_semantics<arbitrary>], iteration_bounds = array<i64: 1>, scalar_prefetch = 0 : i64, scratch_operands = 1 : i64, tpu.core_type = #tpu.core_type<tc>, window_params = [{transform_indices = @transform_0, window_bounds = array<i64: 64, 128>}, {pipeline_mode = #tpu.pipeline_mode<synchronous>, transform_indices = @transform_1, window_bounds = array<i64: 8, 128>}, {pipeline_mode = #tpu.pipeline_mode<synchronous>, transform_indices = @transform_2, window_bounds = array<i64: 128, 384>}, {pipeline_mode = #tpu.pipeline_mode<synchronous>, transform_indices = @transform_3, window_bounds = array<i64: 128, 384>}, {pipeline_mode = #tpu.pipeline_mode<synchronous>, transform_indices = @transform_4, window_bounds = array<i64: 1, 384>}, {pipeline_mode = #tpu.pipeline_mode<synchronous>, transform_indices = @transform_5, window_bounds = array<i64: 1, 128>}, {pipeline_mode = #tpu.pipeline_mode<synchronous>, transform_indices = @transform_6, window_bounds = array<i64: 8, 128>}]} {
    %c0_i32 = arith.constant 0 : i32
    %0 = arith.cmpi eq, %arg0, %c0_i32 : i32
    %1 = arith.extui %0 : i1 to i32
    %c0_i32_0 = arith.constant 0 : i32
    %2 = arith.cmpi ne, %1, %c0_i32_0 : i32
    scf.if %2 {
      %c0_71 = arith.constant 0 : index
      %c0_72 = arith.constant 0 : index
      %231 = vector.load %arg2[%c0_71, %c0_72] : memref<8x128xf32, #tpu.memory_space<vmem>>, vector<8x128xf32>
      %c0_73 = arith.constant 0 : index
      %c0_74 = arith.constant 0 : index
      %232 = vector.load %arg7[%c0_73, %c0_74] : memref<8x128xf32, #tpu.memory_space<vmem>>, vector<8x128xf32>
      tpu.vector_store %arg7[%c0_73, %c0_74], %231 {strides = array<i32>} : memref<8x128xf32, #tpu.memory_space<vmem>>, vector<8x128xf32>,
    } else {
    }
    %c0 = arith.constant 0 : index
    %c0_1 = arith.constant 0 : index
    %3 = vector.load %arg1[%c0, %c0_1] : memref<64x128xbf16, #tpu.memory_space<vmem>>, vector<64x128xbf16>
    %c0_2 = arith.constant 0 : index
    %c0_3 = arith.constant 0 : index
    %4 = vector.load %arg3[%c0_2, %c0_3] : memref<128x384xbf16, #tpu.memory_space<vmem>>, vector<128x384xbf16>
    %cst = arith.constant dense<0.000000e+00> : vector<64x384xf32>
    %5 = tpu.matmul %3, %4, %cst {dimension_numbers = #tpu.dot_dimension_numbers<[1], [0], [0], [1], [0, 0, 1, 1], [], []>} : vector<64x128xbf16>, vector<128x384xbf16>, vector<64x384xf32> -> vector<64x384xf32>
    %c0_4 = arith.constant 0 : index
    %c0_5 = arith.constant 0 : index
    %6 = vector.load %arg5[%c0_4, %c0_5] : memref<1x384xf32, #tpu.memory_space<vmem>>, vector<1x384xf32>
    %7 = vector.broadcast %6 : vector<1x384xf32> to vector<64x384xf32>
    %8 = arith.addf %5, %7 : vector<64x384xf32>
    %c0_6 = arith.constant 0 : index
    %c0_7 = arith.constant 0 : index
    %9 = vector.load %arg8[%c0_6, %c0_7] : memref<64x384xf32, #tpu.memory_space<vmem>>, vector<64x384xf32>
    tpu.vector_store %arg8[%c0_6, %c0_7], %8 {strides = array<i32>} : memref<64x384xf32, #tpu.memory_space<vmem>>, vector<64x384xf32>,
    %c0_8 = arith.constant 0 : index
    %c0_9 = arith.constant 0 : index
    %10 = vector.load %arg6[%c0_8, %c0_9] : memref<1x128xf32, #tpu.memory_space<vmem>>, vector<1x128xf32>
    %11 = vector.shape_cast %10 : vector<1x128xf32> to vector<1x128xf32>
    %12 = vector.broadcast %11 : vector<1x128xf32> to vector<8x128xf32>
    %c0_10 = arith.constant 0 : index
    %c0_11 = arith.constant 0 : index
    %13 = vector.load %arg7[%c0_10, %c0_11] : memref<8x128xf32, #tpu.memory_space<vmem>>, vector<8x128xf32>
    %c0_i32_12 = arith.constant 0 : i32
    %c8_i32 = arith.constant 8 : i32
    %14 = arith.muli %c0_i32_12, %c8_i32 : i32
    %15 = tpu.assume_multiple %14, 8 : i32
    %16 = arith.index_cast %15 : i32 to index
    %c0_13 = arith.constant 0 : index
    %17 = vector.load %arg8[%16, %c0_13] : memref<64x384xf32, #tpu.memory_space<vmem>>, vector<8x384xf32>
    %c0_14 = arith.constant 0 : index
    %c0_15 = arith.constant 0 : index
    %18 = vector.load %arg4[%c0_14, %c0_15] : memref<128x384xf32, #tpu.memory_space<vmem>>, vector<128x384xf32>
    %cst_16 = arith.constant dense<0.000000e+00> : vector<8x384xf32>
    %19 = tpu.matmul %13, %18, %cst_16 {dimension_numbers = #tpu.dot_dimension_numbers<[1], [0], [0], [1], [0, 0, 1, 1], [], []>} : vector<8x128xf32>, vector<128x384xf32>, vector<8x384xf32> -> vector<8x384xf32>
    %20 = vector.extract_strided_slice %17 {offsets = [0, 0], sizes = [8, 256], strides = [1, 1]} : vector<8x384xf32> to vector<8x256xf32>
    %21 = vector.extract_strided_slice %19 {offsets = [0, 0], sizes = [8, 256], strides = [1, 1]} : vector<8x384xf32> to vector<8x256xf32>
    %22 = arith.addf %20, %21 : vector<8x256xf32>
    %23 = arith.negf %22 : vector<8x256xf32>
    %24 = math.exp %23 : vector<8x256xf32>
    %cst_17 = arith.constant 1.000000e+00 : f32
    %25 = vector.broadcast %cst_17 : f32 to vector<8x256xf32>
    %26 = arith.addf %25, %24 : vector<8x256xf32>
    %27 = arith.divf %25, %26 : vector<8x256xf32>
    %28 = vector.extract_strided_slice %27 {offsets = [0, 0], sizes = [8, 128], strides = [1, 1]} : vector<8x256xf32> to vector<8x128xf32>
    %29 = vector.extract_strided_slice %27 {offsets = [0, 128], sizes = [8, 128], strides = [1, 1]} : vector<8x256xf32> to vector<8x128xf32>
    %30 = vector.extract_strided_slice %17 {offsets = [0, 256], sizes = [8, 128], strides = [1, 1]} : vector<8x384xf32> to vector<8x128xf32>
    %31 = vector.extract_strided_slice %19 {offsets = [0, 256], sizes = [8, 128], strides = [1, 1]} : vector<8x384xf32> to vector<8x128xf32>
    %32 = arith.addf %31, %12 : vector<8x128xf32>
    %33 = arith.mulf %28, %32 : vector<8x128xf32>
    %34 = arith.addf %30, %33 : vector<8x128xf32>
    %35 = math.tanh %34 : vector<8x128xf32>
    %cst_18 = arith.constant 1.000000e+00 : f32
    %36 = vector.broadcast %cst_18 : f32 to vector<8x128xf32>
    %37 = arith.subf %36, %29 : vector<8x128xf32>
    %38 = arith.mulf %37, %35 : vector<8x128xf32>
    %39 = arith.mulf %29, %13 : vector<8x128xf32>
    %40 = arith.addf %38, %39 : vector<8x128xf32>
    %c1_i32 = arith.constant 1 : i32
    %c8_i32_19 = arith.constant 8 : i32
    %41 = arith.muli %c1_i32, %c8_i32_19 : i32
    %42 = tpu.assume_multiple %41, 8 : i32
    %43 = arith.index_cast %42 : i32 to index
    %c0_20 = arith.constant 0 : index
    %44 = vector.load %arg8[%43, %c0_20] : memref<64x384xf32, #tpu.memory_space<vmem>>, vector<8x384xf32>
    %c0_21 = arith.constant 0 : index
    %c0_22 = arith.constant 0 : index
    %45 = vector.load %arg4[%c0_21, %c0_22] : memref<128x384xf32, #tpu.memory_space<vmem>>, vector<128x384xf32>
    %cst_23 = arith.constant dense<0.000000e+00> : vector<8x384xf32>
    %46 = tpu.matmul %40, %45, %cst_23 {dimension_numbers = #tpu.dot_dimension_numbers<[1], [0], [0], [1], [0, 0, 1, 1], [], []>} : vector<8x128xf32>, vector<128x384xf32>, vector<8x384xf32> -> vector<8x384xf32>
    %47 = vector.extract_strided_slice %44 {offsets = [0, 0], sizes = [8, 256], strides = [1, 1]} : vector<8x384xf32> to vector<8x256xf32>
    %48 = vector.extract_strided_slice %46 {offsets = [0, 0], sizes = [8, 256], strides = [1, 1]} : vector<8x384xf32> to vector<8x256xf32>
    %49 = arith.addf %47, %48 : vector<8x256xf32>
    %50 = arith.negf %49 : vector<8x256xf32>
    %51 = math.exp %50 : vector<8x256xf32>
    %cst_24 = arith.constant 1.000000e+00 : f32
    %52 = vector.broadcast %cst_24 : f32 to vector<8x256xf32>
    %53 = arith.addf %52, %51 : vector<8x256xf32>
    %54 = arith.divf %52, %53 : vector<8x256xf32>
    %55 = vector.extract_strided_slice %54 {offsets = [0, 0], sizes = [8, 128], strides = [1, 1]} : vector<8x256xf32> to vector<8x128xf32>
    %56 = vector.extract_strided_slice %54 {offsets = [0, 128], sizes = [8, 128], strides = [1, 1]} : vector<8x256xf32> to vector<8x128xf32>
    %57 = vector.extract_strided_slice %44 {offsets = [0, 256], sizes = [8, 128], strides = [1, 1]} : vector<8x384xf32> to vector<8x128xf32>
    %58 = vector.extract_strided_slice %46 {offsets = [0, 256], sizes = [8, 128], strides = [1, 1]} : vector<8x384xf32> to vector<8x128xf32>
    %59 = arith.addf %58, %12 : vector<8x128xf32>
    %60 = arith.mulf %55, %59 : vector<8x128xf32>
    %61 = arith.addf %57, %60 : vector<8x128xf32>
    %62 = math.tanh %61 : vector<8x128xf32>
    %cst_25 = arith.constant 1.000000e+00 : f32
    %63 = vector.broadcast %cst_25 : f32 to vector<8x128xf32>
    %64 = arith.subf %63, %56 : vector<8x128xf32>
    %65 = arith.mulf %64, %62 : vector<8x128xf32>
    %66 = arith.mulf %56, %40 : vector<8x128xf32>
    %67 = arith.addf %65, %66 : vector<8x128xf32>
    %c2_i32 = arith.constant 2 : i32
    %c8_i32_26 = arith.constant 8 : i32
    %68 = arith.muli %c2_i32, %c8_i32_26 : i32
    %69 = tpu.assume_multiple %68, 8 : i32
    %70 = arith.index_cast %69 : i32 to index
    %c0_27 = arith.constant 0 : index
    %71 = vector.load %arg8[%70, %c0_27] : memref<64x384xf32, #tpu.memory_space<vmem>>, vector<8x384xf32>
    %c0_28 = arith.constant 0 : index
    %c0_29 = arith.constant 0 : index
    %72 = vector.load %arg4[%c0_28, %c0_29] : memref<128x384xf32, #tpu.memory_space<vmem>>, vector<128x384xf32>
    %cst_30 = arith.constant dense<0.000000e+00> : vector<8x384xf32>
    %73 = tpu.matmul %67, %72, %cst_30 {dimension_numbers = #tpu.dot_dimension_numbers<[1], [0], [0], [1], [0, 0, 1, 1], [], []>} : vector<8x128xf32>, vector<128x384xf32>, vector<8x384xf32> -> vector<8x384xf32>
    %74 = vector.extract_strided_slice %71 {offsets = [0, 0], sizes = [8, 256], strides = [1, 1]} : vector<8x384xf32> to vector<8x256xf32>
    %75 = vector.extract_strided_slice %73 {offsets = [0, 0], sizes = [8, 256], strides = [1, 1]} : vector<8x384xf32> to vector<8x256xf32>
    %76 = arith.addf %74, %75 : vector<8x256xf32>
    %77 = arith.negf %76 : vector<8x256xf32>
    %78 = math.exp %77 : vector<8x256xf32>
    %cst_31 = arith.constant 1.000000e+00 : f32
    %79 = vector.broadcast %cst_31 : f32 to vector<8x256xf32>
    %80 = arith.addf %79, %78 : vector<8x256xf32>
    %81 = arith.divf %79, %80 : vector<8x256xf32>
    %82 = vector.extract_strided_slice %81 {offsets = [0, 0], sizes = [8, 128], strides = [1, 1]} : vector<8x256xf32> to vector<8x128xf32>
    %83 = vector.extract_strided_slice %81 {offsets = [0, 128], sizes = [8, 128], strides = [1, 1]} : vector<8x256xf32> to vector<8x128xf32>
    %84 = vector.extract_strided_slice %71 {offsets = [0, 256], sizes = [8, 128], strides = [1, 1]} : vector<8x384xf32> to vector<8x128xf32>
    %85 = vector.extract_strided_slice %73 {offsets = [0, 256], sizes = [8, 128], strides = [1, 1]} : vector<8x384xf32> to vector<8x128xf32>
    %86 = arith.addf %85, %12 : vector<8x128xf32>
    %87 = arith.mulf %82, %86 : vector<8x128xf32>
    %88 = arith.addf %84, %87 : vector<8x128xf32>
    %89 = math.tanh %88 : vector<8x128xf32>
    %cst_32 = arith.constant 1.000000e+00 : f32
    %90 = vector.broadcast %cst_32 : f32 to vector<8x128xf32>
    %91 = arith.subf %90, %83 : vector<8x128xf32>
    %92 = arith.mulf %91, %89 : vector<8x128xf32>
    %93 = arith.mulf %83, %67 : vector<8x128xf32>
    %94 = arith.addf %92, %93 : vector<8x128xf32>
    %c3_i32 = arith.constant 3 : i32
    %c8_i32_33 = arith.constant 8 : i32
    %95 = arith.muli %c3_i32, %c8_i32_33 : i32
    %96 = tpu.assume_multiple %95, 8 : i32
    %97 = arith.index_cast %96 : i32 to index
    %c0_34 = arith.constant 0 : index
    %98 = vector.load %arg8[%97, %c0_34] : memref<64x384xf32, #tpu.memory_space<vmem>>, vector<8x384xf32>
    %c0_35 = arith.constant 0 : index
    %c0_36 = arith.constant 0 : index
    %99 = vector.load %arg4[%c0_35, %c0_36] : memref<128x384xf32, #tpu.memory_space<vmem>>, vector<128x384xf32>
    %cst_37 = arith.constant dense<0.000000e+00> : vector<8x384xf32>
    %100 = tpu.matmul %94, %99, %cst_37 {dimension_numbers = #tpu.dot_dimension_numbers<[1], [0], [0], [1], [0, 0, 1, 1], [], []>} : vector<8x128xf32>, vector<128x384xf32>, vector<8x384xf32> -> vector<8x384xf32>
    %101 = vector.extract_strided_slice %98 {offsets = [0, 0], sizes = [8, 256], strides = [1, 1]} : vector<8x384xf32> to vector<8x256xf32>
    %102 = vector.extract_strided_slice %100 {offsets = [0, 0], sizes = [8, 256], strides = [1, 1]} : vector<8x384xf32> to vector<8x256xf32>
    %103 = arith.addf %101, %102 : vector<8x256xf32>
    %104 = arith.negf %103 : vector<8x256xf32>
    %105 = math.exp %104 : vector<8x256xf32>
    %cst_38 = arith.constant 1.000000e+00 : f32
    %106 = vector.broadcast %cst_38 : f32 to vector<8x256xf32>
    %107 = arith.addf %106, %105 : vector<8x256xf32>
    %108 = arith.divf %106, %107 : vector<8x256xf32>
    %109 = vector.extract_strided_slice %108 {offsets = [0, 0], sizes = [8, 128], strides = [1, 1]} : vector<8x256xf32> to vector<8x128xf32>
    %110 = vector.extract_strided_slice %108 {offsets = [0, 128], sizes = [8, 128], strides = [1, 1]} : vector<8x256xf32> to vector<8x128xf32>
    %111 = vector.extract_strided_slice %98 {offsets = [0, 256], sizes = [8, 128], strides = [1, 1]} : vector<8x384xf32> to vector<8x128xf32>
    %112 = vector.extract_strided_slice %100 {offsets = [0, 256], sizes = [8, 128], strides = [1, 1]} : vector<8x384xf32> to vector<8x128xf32>
    %113 = arith.addf %112, %12 : vector<8x128xf32>
    %114 = arith.mulf %109, %113 : vector<8x128xf32>
    %115 = arith.addf %111, %114 : vector<8x128xf32>
    %116 = math.tanh %115 : vector<8x128xf32>
    %cst_39 = arith.constant 1.000000e+00 : f32
    %117 = vector.broadcast %cst_39 : f32 to vector<8x128xf32>
    %118 = arith.subf %117, %110 : vector<8x128xf32>
    %119 = arith.mulf %118, %116 : vector<8x128xf32>
    %120 = arith.mulf %110, %94 : vector<8x128xf32>
    %121 = arith.addf %119, %120 : vector<8x128xf32>
    %c4_i32 = arith.constant 4 : i32
    %c8_i32_40 = arith.constant 8 : i32
    %122 = arith.muli %c4_i32, %c8_i32_40 : i32
    %123 = tpu.assume_multiple %122, 8 : i32
    %124 = arith.index_cast %123 : i32 to index
    %c0_41 = arith.constant 0 : index
    %125 = vector.load %arg8[%124, %c0_41] : memref<64x384xf32, #tpu.memory_space<vmem>>, vector<8x384xf32>
    %c0_42 = arith.constant 0 : index
    %c0_43 = arith.constant 0 : index
    %126 = vector.load %arg4[%c0_42, %c0_43] : memref<128x384xf32, #tpu.memory_space<vmem>>, vector<128x384xf32>
    %cst_44 = arith.constant dense<0.000000e+00> : vector<8x384xf32>
    %127 = tpu.matmul %121, %126, %cst_44 {dimension_numbers = #tpu.dot_dimension_numbers<[1], [0], [0], [1], [0, 0, 1, 1], [], []>} : vector<8x128xf32>, vector<128x384xf32>, vector<8x384xf32> -> vector<8x384xf32>
    %128 = vector.extract_strided_slice %125 {offsets = [0, 0], sizes = [8, 256], strides = [1, 1]} : vector<8x384xf32> to vector<8x256xf32>
    %129 = vector.extract_strided_slice %127 {offsets = [0, 0], sizes = [8, 256], strides = [1, 1]} : vector<8x384xf32> to vector<8x256xf32>
    %130 = arith.addf %128, %129 : vector<8x256xf32>
    %131 = arith.negf %130 : vector<8x256xf32>
    %132 = math.exp %131 : vector<8x256xf32>
    %cst_45 = arith.constant 1.000000e+00 : f32
    %133 = vector.broadcast %cst_45 : f32 to vector<8x256xf32>
    %134 = arith.addf %133, %132 : vector<8x256xf32>
    %135 = arith.divf %133, %134 : vector<8x256xf32>
    %136 = vector.extract_strided_slice %135 {offsets = [0, 0], sizes = [8, 128], strides = [1, 1]} : vector<8x256xf32> to vector<8x128xf32>
    %137 = vector.extract_strided_slice %135 {offsets = [0, 128], sizes = [8, 128], strides = [1, 1]} : vector<8x256xf32> to vector<8x128xf32>
    %138 = vector.extract_strided_slice %125 {offsets = [0, 256], sizes = [8, 128], strides = [1, 1]} : vector<8x384xf32> to vector<8x128xf32>
    %139 = vector.extract_strided_slice %127 {offsets = [0, 256], sizes = [8, 128], strides = [1, 1]} : vector<8x384xf32> to vector<8x128xf32>
    %140 = arith.addf %139, %12 : vector<8x128xf32>
    %141 = arith.mulf %136, %140 : vector<8x128xf32>
    %142 = arith.addf %138, %141 : vector<8x128xf32>
    %143 = math.tanh %142 : vector<8x128xf32>
    %cst_46 = arith.constant 1.000000e+00 : f32
    %144 = vector.broadcast %cst_46 : f32 to vector<8x128xf32>
    %145 = arith.subf %144, %137 : vector<8x128xf32>
    %146 = arith.mulf %145, %143 : vector<8x128xf32>
    %147 = arith.mulf %137, %121 : vector<8x128xf32>
    %148 = arith.addf %146, %147 : vector<8x128xf32>
    %c5_i32 = arith.constant 5 : i32
    %c8_i32_47 = arith.constant 8 : i32
    %149 = arith.muli %c5_i32, %c8_i32_47 : i32
    %150 = tpu.assume_multiple %149, 8 : i32
    %151 = arith.index_cast %150 : i32 to index
    %c0_48 = arith.constant 0 : index
    %152 = vector.load %arg8[%151, %c0_48] : memref<64x384xf32, #tpu.memory_space<vmem>>, vector<8x384xf32>
    %c0_49 = arith.constant 0 : index
    %c0_50 = arith.constant 0 : index
    %153 = vector.load %arg4[%c0_49, %c0_50] : memref<128x384xf32, #tpu.memory_space<vmem>>, vector<128x384xf32>
    %cst_51 = arith.constant dense<0.000000e+00> : vector<8x384xf32>
    %154 = tpu.matmul %148, %153, %cst_51 {dimension_numbers = #tpu.dot_dimension_numbers<[1], [0], [0], [1], [0, 0, 1, 1], [], []>} : vector<8x128xf32>, vector<128x384xf32>, vector<8x384xf32> -> vector<8x384xf32>
    %155 = vector.extract_strided_slice %152 {offsets = [0, 0], sizes = [8, 256], strides = [1, 1]} : vector<8x384xf32> to vector<8x256xf32>
    %156 = vector.extract_strided_slice %154 {offsets = [0, 0], sizes = [8, 256], strides = [1, 1]} : vector<8x384xf32> to vector<8x256xf32>
    %157 = arith.addf %155, %156 : vector<8x256xf32>
    %158 = arith.negf %157 : vector<8x256xf32>
    %159 = math.exp %158 : vector<8x256xf32>
    %cst_52 = arith.constant 1.000000e+00 : f32
    %160 = vector.broadcast %cst_52 : f32 to vector<8x256xf32>
    %161 = arith.addf %160, %159 : vector<8x256xf32>
    %162 = arith.divf %160, %161 : vector<8x256xf32>
    %163 = vector.extract_strided_slice %162 {offsets = [0, 0], sizes = [8, 128], strides = [1, 1]} : vector<8x256xf32> to vector<8x128xf32>
    %164 = vector.extract_strided_slice %162 {offsets = [0, 128], sizes = [8, 128], strides = [1, 1]} : vector<8x256xf32> to vector<8x128xf32>
    %165 = vector.extract_strided_slice %152 {offsets = [0, 256], sizes = [8, 128], strides = [1, 1]} : vector<8x384xf32> to vector<8x128xf32>
    %166 = vector.extract_strided_slice %154 {offsets = [0, 256], sizes = [8, 128], strides = [1, 1]} : vector<8x384xf32> to vector<8x128xf32>
    %167 = arith.addf %166, %12 : vector<8x128xf32>
    %168 = arith.mulf %163, %167 : vector<8x128xf32>
    %169 = arith.addf %165, %168 : vector<8x128xf32>
    %170 = math.tanh %169 : vector<8x128xf32>
    %cst_53 = arith.constant 1.000000e+00 : f32
    %171 = vector.broadcast %cst_53 : f32 to vector<8x128xf32>
    %172 = arith.subf %171, %164 : vector<8x128xf32>
    %173 = arith.mulf %172, %170 : vector<8x128xf32>
    %174 = arith.mulf %164, %148 : vector<8x128xf32>
    %175 = arith.addf %173, %174 : vector<8x128xf32>
    %c6_i32 = arith.constant 6 : i32
    %c8_i32_54 = arith.constant 8 : i32
    %176 = arith.muli %c6_i32, %c8_i32_54 : i32
    %177 = tpu.assume_multiple %176, 8 : i32
    %178 = arith.index_cast %177 : i32 to index
    %c0_55 = arith.constant 0 : index
    %179 = vector.load %arg8[%178, %c0_55] : memref<64x384xf32, #tpu.memory_space<vmem>>, vector<8x384xf32>
    %c0_56 = arith.constant 0 : index
    %c0_57 = arith.constant 0 : index
    %180 = vector.load %arg4[%c0_56, %c0_57] : memref<128x384xf32, #tpu.memory_space<vmem>>, vector<128x384xf32>
    %cst_58 = arith.constant dense<0.000000e+00> : vector<8x384xf32>
    %181 = tpu.matmul %175, %180, %cst_58 {dimension_numbers = #tpu.dot_dimension_numbers<[1], [0], [0], [1], [0, 0, 1, 1], [], []>} : vector<8x128xf32>, vector<128x384xf32>, vector<8x384xf32> -> vector<8x384xf32>
    %182 = vector.extract_strided_slice %179 {offsets = [0, 0], sizes = [8, 256], strides = [1, 1]} : vector<8x384xf32> to vector<8x256xf32>
    %183 = vector.extract_strided_slice %181 {offsets = [0, 0], sizes = [8, 256], strides = [1, 1]} : vector<8x384xf32> to vector<8x256xf32>
    %184 = arith.addf %182, %183 : vector<8x256xf32>
    %185 = arith.negf %184 : vector<8x256xf32>
    %186 = math.exp %185 : vector<8x256xf32>
    %cst_59 = arith.constant 1.000000e+00 : f32
    %187 = vector.broadcast %cst_59 : f32 to vector<8x256xf32>
    %188 = arith.addf %187, %186 : vector<8x256xf32>
    %189 = arith.divf %187, %188 : vector<8x256xf32>
    %190 = vector.extract_strided_slice %189 {offsets = [0, 0], sizes = [8, 128], strides = [1, 1]} : vector<8x256xf32> to vector<8x128xf32>
    %191 = vector.extract_strided_slice %189 {offsets = [0, 128], sizes = [8, 128], strides = [1, 1]} : vector<8x256xf32> to vector<8x128xf32>
    %192 = vector.extract_strided_slice %179 {offsets = [0, 256], sizes = [8, 128], strides = [1, 1]} : vector<8x384xf32> to vector<8x128xf32>
    %193 = vector.extract_strided_slice %181 {offsets = [0, 256], sizes = [8, 128], strides = [1, 1]} : vector<8x384xf32> to vector<8x128xf32>
    %194 = arith.addf %193, %12 : vector<8x128xf32>
    %195 = arith.mulf %190, %194 : vector<8x128xf32>
    %196 = arith.addf %192, %195 : vector<8x128xf32>
    %197 = math.tanh %196 : vector<8x128xf32>
    %cst_60 = arith.constant 1.000000e+00 : f32
    %198 = vector.broadcast %cst_60 : f32 to vector<8x128xf32>
    %199 = arith.subf %198, %191 : vector<8x128xf32>
    %200 = arith.mulf %199, %197 : vector<8x128xf32>
    %201 = arith.mulf %191, %175 : vector<8x128xf32>
    %202 = arith.addf %200, %201 : vector<8x128xf32>
    %c7_i32 = arith.constant 7 : i32
    %c8_i32_61 = arith.constant 8 : i32
    %203 = arith.muli %c7_i32, %c8_i32_61 : i32
    %204 = tpu.assume_multiple %203, 8 : i32
    %205 = arith.index_cast %204 : i32 to index
    %c0_62 = arith.constant 0 : index
    %206 = vector.load %arg8[%205, %c0_62] : memref<64x384xf32, #tpu.memory_space<vmem>>, vector<8x384xf32>
    %c0_63 = arith.constant 0 : index
    %c0_64 = arith.constant 0 : index
    %207 = vector.load %arg4[%c0_63, %c0_64] : memref<128x384xf32, #tpu.memory_space<vmem>>, vector<128x384xf32>
    %cst_65 = arith.constant dense<0.000000e+00> : vector<8x384xf32>
    %208 = tpu.matmul %202, %207, %cst_65 {dimension_numbers = #tpu.dot_dimension_numbers<[1], [0], [0], [1], [0, 0, 1, 1], [], []>} : vector<8x128xf32>, vector<128x384xf32>, vector<8x384xf32> -> vector<8x384xf32>
    %209 = vector.extract_strided_slice %206 {offsets = [0, 0], sizes = [8, 256], strides = [1, 1]} : vector<8x384xf32> to vector<8x256xf32>
    %210 = vector.extract_strided_slice %208 {offsets = [0, 0], sizes = [8, 256], strides = [1, 1]} : vector<8x384xf32> to vector<8x256xf32>
    %211 = arith.addf %209, %210 : vector<8x256xf32>
    %212 = arith.negf %211 : vector<8x256xf32>
    %213 = math.exp %212 : vector<8x256xf32>
    %cst_66 = arith.constant 1.000000e+00 : f32
    %214 = vector.broadcast %cst_66 : f32 to vector<8x256xf32>
    %215 = arith.addf %214, %213 : vector<8x256xf32>
    %216 = arith.divf %214, %215 : vector<8x256xf32>
    %217 = vector.extract_strided_slice %216 {offsets = [0, 0], sizes = [8, 128], strides = [1, 1]} : vector<8x256xf32> to vector<8x128xf32>
    %218 = vector.extract_strided_slice %216 {offsets = [0, 128], sizes = [8, 128], strides = [1, 1]} : vector<8x256xf32> to vector<8x128xf32>
    %219 = vector.extract_strided_slice %206 {offsets = [0, 256], sizes = [8, 128], strides = [1, 1]} : vector<8x384xf32> to vector<8x128xf32>
    %220 = vector.extract_strided_slice %208 {offsets = [0, 256], sizes = [8, 128], strides = [1, 1]} : vector<8x384xf32> to vector<8x128xf32>
    %221 = arith.addf %220, %12 : vector<8x128xf32>
    %222 = arith.mulf %217, %221 : vector<8x128xf32>
    %223 = arith.addf %219, %222 : vector<8x128xf32>
    %224 = math.tanh %223 : vector<8x128xf32>
    %cst_67 = arith.constant 1.000000e+00 : f32
    %225 = vector.broadcast %cst_67 : f32 to vector<8x128xf32>
    %226 = arith.subf %225, %218 : vector<8x128xf32>
    %227 = arith.mulf %226, %224 : vector<8x128xf32>
    %228 = arith.mulf %218, %202 : vector<8x128xf32>
    %229 = arith.addf %227, %228 : vector<8x128xf32>
    %c8_i32_68 = arith.constant 8 : i32
    %c0_69 = arith.constant 0 : index
    %c0_70 = arith.constant 0 : index
    %230 = vector.load %arg7[%c0_69, %c0_70] : memref<8x128xf32, #tpu.memory_space<vmem>>, vector<8x128xf32>
    tpu.vector_store %arg7[%c0_69, %c0_70], %229 {strides = array<i32>} : memref<8x128xf32, #tpu.memory_space<vmem>>, vector<8x128xf32>,
    return
  }
  func.func @transform_0(%arg0: i32) -> (i32, i32) {
    %c0_i32 = arith.constant 0 : i32
    %c0_i32_0 = arith.constant 0 : i32
    return %arg0, %c0_i32 : i32, i32
  }
  func.func @transform_1(%arg0: i32) -> (i32, i32) {
    %c0_i32 = arith.constant 0 : i32
    %c0_i32_0 = arith.constant 0 : i32
    %c0_i32_1 = arith.constant 0 : i32
    return %c0_i32, %c0_i32_0 : i32, i32
  }
  func.func @transform_2(%arg0: i32) -> (i32, i32) {
    %c0_i32 = arith.constant 0 : i32
    %c0_i32_0 = arith.constant 0 : i32
    %c0_i32_1 = arith.constant 0 : i32
    return %c0_i32, %c0_i32_0 : i32, i32
  }
  func.func @transform_3(%arg0: i32) -> (i32, i32) {
    %c0_i32 = arith.constant 0 : i32
    %c0_i32_0 = arith.constant 0 : i32
    %c0_i32_1 = arith.constant 0 : i32
    return %c0_i32, %c0_i32_0 : i32, i32
  }
  func.func @transform_4(%arg0: i32) -> (i32, i32) {
    %c0_i32 = arith.constant 0 : i32
    %c0_i32_0 = arith.constant 0 : i32
    %c0_i32_1 = arith.constant 0 : i32
    return %c0_i32, %c0_i32_0 : i32, i32
  }
  func.func @transform_5(%arg0: i32) -> (i32, i32) {
    %c0_i32 = arith.constant 0 : i32
    %c0_i32_0 = arith.constant 0 : i32
    %c0_i32_1 = arith.constant 0 : i32
    return %c0_i32, %c0_i32_0 : i32, i32
  }
  func.func @transform_6(%arg0: i32) -> (i32, i32) {
    %c0_i32 = arith.constant 0 : i32
    %c0_i32_0 = arith.constant 0 : i32
    %c0_i32_1 = arith.constant 0 : i32
    return %c0_i32, %c0_i32_0 : i32, i32
  }
}

</mosaic_0001>

<llo_original>
// kernel: tpu_custom_call.1
$region0: #{tpu_custom_call.1}
  #allocation0 [shape = 'u32[]', space=smem, size = 0x4, offset = 0x4, fixed_abs, tag = 'smem constant byte address 0x4 - core index']
  #allocation1 [shape = 'u32[144,128]{1,0:T(1,128)}', space=vmem, size = 0x12000, scoped, tag = 'internal scratch']
  #allocation2 [shape = 'f32[64,384]{1,0:T(8,128)}', space=vmem, size = 0x18000, scoped, tag = 'scratch operand']
  %s0 = inlined_call_operand.hbm [shape: bf16[64,128], index: 0, kind: input, shape index: {}]
  %s1 = inlined_call_operand.hbm [shape: f32[8,128], index: 1, kind: input, shape index: {}]
  %s2 = inlined_call_operand.hbm [shape: bf16[128,384], index: 2, kind: input, shape index: {}]
  %s3 = inlined_call_operand.hbm [shape: f32[128,384], index: 3, kind: input, shape index: {}]
  %s4 = inlined_call_operand.vmem [shape: f32[1,384], index: 4, kind: input, shape index: {}]
  %s5 = inlined_call_operand.vmem [shape: f32[1,128], index: 5, kind: input, shape index: {}]
  %s6 = inlined_call_operand.hbm [shape: f32[8,128], index: 6, kind: output, shape index: {}]
  %s7 = sld [smem:[#allocation0]]
  $region54: #{tpu_custom_call.1} parent=0
    _
  %s9 = ssub.s32 1, %s7
  %s10 = scalar_select 0, %s9, %s7
  $region1: #{tpu_custom_call.1} parent=0
    #allocation3 [shape = 'u8[16384]{0}', space=vmem, size = 0x4000, scoped, tag = 'input window, operand 0, single buffered']
    #allocation4 [shape = 's32[1]{0}', space=sflag, size = 0x4, scoped, tag = 'scoped memory for tpu_custom_call.1']
    #allocation5 [shape = 's32[1]{0}', space=sflag, size = 0x4, scoped, tag = 'scoped memory for tpu_custom_call.1']
    #allocation6 [shape = 'u8[4096]{0}', space=vmem, size = 0x1000, scoped, tag = 'input window, operand 1, single buffered']
    #allocation7 [shape = 's32[1]{0}', space=sflag, size = 0x4, scoped, tag = 'scoped memory for tpu_custom_call.1']
    #allocation8 [shape = 'u8[98304]{0}', space=vmem, size = 0x18000, scoped, tag = 'input window, operand 2, single buffered']
    #allocation9 [shape = 'u8[196608]{0}', space=vmem, size = 0x30000, scoped, tag = 'input window, operand 3, single buffered']
    #allocation10 [shape = 's32[1]{0}', space=sflag, size = 0x4, scoped, tag = 'scoped memory for tpu_custom_call.1']
    #allocation11 [shape = 'u8[4096]{0}', space=vmem, size = 0x1000, scoped, tag = 'output window, operand 0, single buffered']
    %11 = vsyncpa [#allocation4], 0
    %12 = vsyncpa [#allocation7], 0
    %13 = vsyncpa [#allocation10], 0
    %14 = vsyncpa [#allocation5], 0
    // Predicated region
    $region2: #{tpu_custom_call.1} parent=1 // pred_check
      _
    $region3: #{tpu_custom_call.1} parent=1 // pred_check_branch
      %16 = sbr.rel (0) target = $region5
    $region4: #{tpu_custom_call.1} parent=1 // pred_region
      %s18 = ssub.s32 512, 512
      %19 = vsyncadd [#allocation4], %s18
      %s20 = sshll.u32 [#allocation3], 4
      %s21 = int_to_ptr.vmem [resolvable:$true] %s20
      %26 = dma.hbm_to_vmem [thread:$0]  %s0, 512, %s21, [#allocation4], 64, 64, 4
    $region5: #{tpu_custom_call.1} parent=1 // pred_fallthru
      _
    // Predicated region
    $region6: #{tpu_custom_call.1} parent=1 // pred_check
      _
    $region7: #{tpu_custom_call.1} parent=1 // pred_check_branch
      %28 = sbr.rel (0) target = $region9
    $region8: #{tpu_custom_call.1} parent=1 // pred_region
      %s30 = ssub.s32 128, 128
      %31 = vsyncadd [#allocation7], %s30
      %s33 = sshll.u32 [#allocation6], 4
      %s34 = int_to_ptr.vmem [resolvable:$true] %s33
      %36 = dma.hbm_to_vmem [thread:$0]  %s1, 128, %s34, [#allocation7]
    $region9: #{tpu_custom_call.1} parent=1 // pred_fallthru
      _
    // Predicated region
    $region10: #{tpu_custom_call.1} parent=1 // pred_check
      _
    $region11: #{tpu_custom_call.1} parent=1 // pred_check_branch
      %38 = sbr.rel (0) target = $region13
    $region12: #{tpu_custom_call.1} parent=1 // pred_region
      %s40 = ssub.s32 3072, 3072
      %41 = vsyncadd [#allocation7], %s40
      %s42 = sshll.u32 [#allocation8], 4
      %s43 = int_to_ptr.vmem [resolvable:$true] %s42
      %48 = dma.hbm_to_vmem [thread:$0]  %s2, 3072, %s43, [#allocation7], 192, 192, 12
    $region13: #{tpu_custom_call.1} parent=1 // pred_fallthru
      _
    // Predicated region
    $region14: #{tpu_custom_call.1} parent=1 // pred_check
      _
    $region15: #{tpu_custom_call.1} parent=1 // pred_check_branch
      %50 = sbr.rel (0) target = $region17
    $region16: #{tpu_custom_call.1} parent=1 // pred_region
      %s52 = ssub.s32 6144, 6144
      %53 = vsyncadd [#allocation10], %s52
      %s54 = sshll.u32 [#allocation9], 4
      %s55 = int_to_ptr.vmem [resolvable:$true] %s54
      %60 = dma.hbm_to_vmem [thread:$0]  %s3, 6144, %s55, [#allocation10], 384, 384, 24
    $region17: #{tpu_custom_call.1} parent=1 // pred_fallthru
      _
    // Predicated region
    $region18: #{tpu_custom_call.1} parent=1 // pred_check
      _
    $region19: #{tpu_custom_call.1} parent=1 // pred_check_branch
      %62 = sbr.rel (0) target = $region21
    $region20: #{tpu_custom_call.1} parent=1 // pred_region
      _
    $region21: #{tpu_custom_call.1} parent=1 // pred_fallthru
      _
    // Predicated region
    $region22: #{tpu_custom_call.1} parent=1 // pred_check
      _
    $region23: #{tpu_custom_call.1} parent=1 // pred_check_branch
      %64 = sbr.rel (0) target = $region25
    $region24: #{tpu_custom_call.1} parent=1 // pred_region
      _
    $region25: #{tpu_custom_call.1} parent=1 // pred_fallthru
      _
    // Predicated region
    $region26: #{tpu_custom_call.1} parent=1 // pred_check
      _
    $region27: #{tpu_custom_call.1} parent=1 // pred_check_branch
      %66 = sbr.rel (0) target = $region29
    $region28: #{tpu_custom_call.1} parent=1 // pred_region
      %67 = dma.done [#allocation4], 512
    $region29: #{tpu_custom_call.1} parent=1 // pred_fallthru
      _
    // Predicated region
    $region30: #{tpu_custom_call.1} parent=1 // pred_check
      _
    $region31: #{tpu_custom_call.1} parent=1 // pred_check_branch
      %69 = sbr.rel (0) target = $region33
    $region32: #{tpu_custom_call.1} parent=1 // pred_region
      %70 = dma.done [#allocation7], 128
    $region33: #{tpu_custom_call.1} parent=1 // pred_fallthru
      _
    // Predicated region
    $region34: #{tpu_custom_call.1} parent=1 // pred_check
      _
    $region35: #{tpu_custom_call.1} parent=1 // pred_check_branch
      %72 = sbr.rel (0) target = $region37
    $region36: #{tpu_custom_call.1} parent=1 // pred_region
      %73 = dma.done [#allocation7], 3072
    $region37: #{tpu_custom_call.1} parent=1 // pred_fallthru
      _
    // Predicated region
    $region38: #{tpu_custom_call.1} parent=1 // pred_check
      _
    $region39: #{tpu_custom_call.1} parent=1 // pred_check_branch
      %75 = sbr.rel (0) target = $region41
    $region40: #{tpu_custom_call.1} parent=1 // pred_region
      %76 = dma.done [#allocation10], 6144
    $region41: #{tpu_custom_call.1} parent=1 // pred_fallthru
      _
    %p78 = scmp.eq.s32.totalorder 0, 0
    // Predicated region
    $region42: #{tpu_custom_call.1} parent=1 // pred_check
      %p79 = pneg %p78
    $region43: #{tpu_custom_call.1} parent=1 // pred_check_branch
      %81 = sbr.rel (%p79) target = $region45
    $region44: #{tpu_custom_call.1} parent=1 // pred_region
      %v82 = vld [vmem:[#allocation6] sm:$0xff]
      %83 = vst [vmem:[#allocation11] sm:$0xff] %v82
    $region45: #{tpu_custom_call.1} parent=1 // pred_fallthru
      _
    %v84 = vld [vmem:[#allocation3] sm:$0xf]
    %v85 = vld [vmem:[#allocation3 + $0x4] sm:$0xf]
    %v86 = vld [vmem:[#allocation3 + $0x8] sm:$0xf]
    %v87 = vld [vmem:[#allocation3 + $0xc] sm:$0xf]
    %v88 = vld [vmem:[#allocation3 + $0x10] sm:$0xf]
    %v89 = vld [vmem:[#allocation3 + $0x14] sm:$0xf]
    %v90 = vld [vmem:[#allocation3 + $0x18] sm:$0xf]
    %v91 = vld [vmem:[#allocation3 + $0x1c] sm:$0xf]
    %v92 = vld [vmem:[#allocation8] sm:$0xff]
    %v93 = vld [vmem:[#allocation8 + $0x8] sm:$0xf]
    %v94 = vld [vmem:[#allocation8 + $0xc] sm:$0xff]
    %v95 = vld [vmem:[#allocation8 + $0x14] sm:$0xf]
    %v96 = vld [vmem:[#allocation8 + $0x18] sm:$0xff]
    %v97 = vld [vmem:[#allocation8 + $0x20] sm:$0xf]
    %v98 = vld [vmem:[#allocation8 + $0x24] sm:$0xff]
    %v99 = vld [vmem:[#allocation8 + $0x2c] sm:$0xf]
    %v100 = vld [vmem:[#allocation8 + $0x30] sm:$0xff]
    %v101 = vld [vmem:[#allocation8 + $0x38] sm:$0xf]
    %v102 = vld [vmem:[#allocation8 + $0x3c] sm:$0xff]
    %v103 = vld [vmem:[#allocation8 + $0x44] sm:$0xf]
    %v104 = vld [vmem:[#allocation8 + $0x48] sm:$0xff]
    %v105 = vld [vmem:[#allocation8 + $0x50] sm:$0xf]
    %v106 = vld [vmem:[#allocation8 + $0x54] sm:$0xff]
    %v107 = vld [vmem:[#allocation8 + $0x5c] sm:$0xf]
    %v108 = vld [vmem:[#allocation8 + $0x60] sm:$0xff]
    %v109 = vld [vmem:[#allocation8 + $0x68] sm:$0xf]
    %v110 = vld [vmem:[#allocation8 + $0x6c] sm:$0xff]
    %v111 = vld [vmem:[#allocation8 + $0x74] sm:$0xf]
    %v112 = vld [vmem:[#allocation8 + $0x78] sm:$0xff]
    %v113 = vld [vmem:[#allocation8 + $0x80] sm:$0xf]
    %v114 = vld [vmem:[#allocation8 + $0x84] sm:$0xff]
    %v115 = vld [vmem:[#allocation8 + $0x8c] sm:$0xf]
    %v116 = vld [vmem:[#allocation8 + $0x90] sm:$0xff]
    %v117 = vld [vmem:[#allocation8 + $0x98] sm:$0xf]
    %v118 = vld [vmem:[#allocation8 + $0x9c] sm:$0xff]
    %v119 = vld [vmem:[#allocation8 + $0xa4] sm:$0xf]
    %v120 = vld [vmem:[#allocation8 + $0xa8] sm:$0xff]
    %v121 = vld [vmem:[#allocation8 + $0xb0] sm:$0xf]
    %v122 = vld [vmem:[#allocation8 + $0xb4] sm:$0xff]
    %v123 = vld [vmem:[#allocation8 + $0xbc] sm:$0xf]
    %v124 = vld [vmem:[%s4] sm:$0x7]
    %v126 = vlaneseq
    %v127 = vshrl.u32 %v126, 7
    %v128 = vsub.s32 0, %v127
    %v129 = vrot.slane %v124, %v128
    %v130 = vlaneseq
    %v131 = vshrl.u32 %v130, 7
    %v132 = vsub.s32 1, %v131
    %v133 = vrot.slane %v124, %v132
    %v134 = vlaneseq
    %v135 = vshrl.u32 %v134, 7
    %v136 = vsub.s32 2, %v135
    %v137 = vrot.slane %v124, %v136
    %v149 = vunpack.c.l.b16 %v84
    %v150 = vunpack.c.l.b16 %v85
    %v151 = vunpack.c.l.b16 %v86
    %v152 = vunpack.c.l.b16 %v87
    %v153 = vunpack.c.l.b16 %v88
    %v154 = vunpack.c.l.b16 %v89
    %v155 = vunpack.c.l.b16 %v90
    %v156 = vunpack.c.l.b16 %v91
    %v157 = vpack.c.b16 %v150, %v149
    %v158 = vpack.c.b16 %v152, %v151
    %v159 = vpack.c.b16 %v154, %v153
    %v160 = vpack.c.b16 %v156, %v155
    %v197 = vunpack.c.l.b16 %v92
    %v198 = vunpack.c.h.b16 %v92
    %v199 = vunpack.c.l.b16 %v93
    %v200 = vunpack.c.l.b16 %v94
    %v201 = vunpack.c.h.b16 %v94
    %v202 = vunpack.c.l.b16 %v95
    %v203 = vunpack.c.l.b16 %v96
    %v204 = vunpack.c.h.b16 %v96
    %v205 = vunpack.c.l.b16 %v97
    %v206 = vunpack.c.l.b16 %v98
    %v207 = vunpack.c.h.b16 %v98
    %v208 = vunpack.c.l.b16 %v99
    %v209 = vunpack.c.l.b16 %v100
    %v210 = vunpack.c.h.b16 %v100
    %v211 = vunpack.c.l.b16 %v101
    %v212 = vunpack.c.l.b16 %v102
    %v213 = vunpack.c.h.b16 %v102
    %v214 = vunpack.c.l.b16 %v103
    %v215 = vunpack.c.l.b16 %v104
    %v216 = vunpack.c.h.b16 %v104
    %v217 = vunpack.c.l.b16 %v105
    %v218 = vunpack.c.l.b16 %v106
    %v219 = vunpack.c.h.b16 %v106
    %v220 = vunpack.c.l.b16 %v107
    %v221 = vunpack.c.l.b16 %v108
    %v222 = vunpack.c.h.b16 %v108
    %v223 = vunpack.c.l.b16 %v109
    %v224 = vunpack.c.l.b16 %v110
    %v225 = vunpack.c.h.b16 %v110
    %v226 = vunpack.c.l.b16 %v111
    %v227 = vunpack.c.l.b16 %v112
    %v228 = vunpack.c.h.b16 %v112
    %v229 = vunpack.c.l.b16 %v113
    %v230 = vunpack.c.l.b16 %v114
    %v231 = vunpack.c.h.b16 %v114
    %v232 = vunpack.c.l.b16 %v115
    %v233 = vunpack.c.l.b16 %v116
    %v234 = vunpack.c.h.b16 %v116
    %v235 = vunpack.c.l.b16 %v117
    %v236 = vunpack.c.l.b16 %v118
    %v237 = vunpack.c.h.b16 %v118
    %v238 = vunpack.c.l.b16 %v119
    %v239 = vunpack.c.l.b16 %v120
    %v240 = vunpack.c.h.b16 %v120
    %v241 = vunpack.c.l.b16 %v121
    %v242 = vunpack.c.l.b16 %v122
    %v243 = vunpack.c.h.b16 %v122
    %v244 = vunpack.c.l.b16 %v123
    %v245 = vpack.c.b16 %v200, %v197
    %v246 = vpack.c.b16 %v201, %v198
    %v247 = vpack.c.b16 %v202, %v199
    %v248 = vpack.c.b16 %v206, %v203
    %v249 = vpack.c.b16 %v207, %v204
    %v250 = vpack.c.b16 %v208, %v205
    %v251 = vpack.c.b16 %v212, %v209
    %v252 = vpack.c.b16 %v213, %v210
    %v253 = vpack.c.b16 %v214, %v211
    %v254 = vpack.c.b16 %v218, %v215
    %v255 = vpack.c.b16 %v219, %v216
    %v256 = vpack.c.b16 %v220, %v217
    %v257 = vpack.c.b16 %v224, %v221
    %v258 = vpack.c.b16 %v225, %v222
    %v259 = vpack.c.b16 %v226, %v223
    %v260 = vpack.c.b16 %v230, %v227
    %v261 = vpack.c.b16 %v231, %v228
    %v262 = vpack.c.b16 %v232, %v229
    %v263 = vpack.c.b16 %v236, %v233
    %v264 = vpack.c.b16 %v237, %v234
    %v265 = vpack.c.b16 %v238, %v235
    %v266 = vpack.c.b16 %v242, %v239
    %v267 = vpack.c.b16 %v243, %v240
    %v268 = vpack.c.b16 %v244, %v241
    %293 = vmatprep.subr.bf16.mxu0 %v246
    %294 = vmatpush1.bf16.msra.mxu0 %v245
    %295 = vmatprep.subr.bf16.mxu0 %v249
    %296 = vmatpush1.bf16.msra.mxu0 %v248
    %297 = vmatprep.subr.bf16.mxu0 %v252
    %298 = vmatpush1.bf16.msra.mxu0 %v251
    %299 = vmatprep.subr.bf16.mxu0 %v255
    %300 = vmatpush1.bf16.msra.mxu0 %v254
    %301 = vmatprep.subr.bf16.mxu0 %v258
    %302 = vmatpush1.bf16.msra.mxu0 %v257
    %303 = vmatprep.subr.bf16.mxu0 %v261
    %304 = vmatpush1.bf16.msra.mxu0 %v260
    %305 = vmatprep.subr.bf16.mxu0 %v264
    %306 = vmatpush1.bf16.msra.mxu0 %v263
    %307 = vmatprep.subr.bf16.mxu0 %v267
    %308 = vmatpush1.bf16.msra.mxu0 %v266
    %309 = vmatprep.subr.bf16.mxu0 0
    %310 = vmatpush1.bf16.msra.mxu0 0
    %311 = vmatprep.subr.bf16.mxu0 0
    %312 = vmatpush1.bf16.msra.mxu0 0
    %313 = vmatprep.subr.bf16.mxu0 0
    %314 = vmatpush1.bf16.msra.mxu0 0
    %315 = vmatprep.subr.bf16.mxu0 0
    %316 = vmatpush1.bf16.msra.mxu0 0
    %317 = vmatprep.subr.bf16.mxu0 0
    %318 = vmatpush1.bf16.msra.mxu0 0
    %319 = vmatprep.subr.bf16.mxu0 0
    %320 = vmatpush1.bf16.msra.mxu0 0
    %321 = vmatprep.subr.bf16.mxu0 0
    %322 = vmatpush1.bf16.msra.mxu0 0
    %323 = vmatprep.subr.bf16.mxu0 0
    %324 = vmatpush1.bf16.msra.mxu0 0
    %325 = vmatprep.mubr.bf16.mxu0 0
    %326 = vmatmul.mubr.bf16.gmra.mrb[0].mxu0 %v157
    %v327 = vpop.f32.mrb[0].mxu0
    %v328 = vadd.f32 %v129, %v327
    %v329 = vpop.f32.mrb[0].mxu0
    %v330 = vadd.f32 %v133, %v329
    %v331 = vpop.f32.mrb[0].mxu0
    %v332 = vadd.f32 %v129, %v331
    %v333 = vpop.f32.mrb[0].mxu0
    %v334 = vadd.f32 %v133, %v333
    %335 = vmatprep.mubr.bf16.mxu0 0
    %336 = vmatmul.mubr.bf16.gmra.mrb[0].mxu0 %v158
    %v337 = vpop.f32.mrb[0].mxu0
    %v338 = vadd.f32 %v129, %v337
    %v339 = vpop.f32.mrb[0].mxu0
    %v340 = vadd.f32 %v133, %v339
    %v341 = vpop.f32.mrb[0].mxu0
    %v342 = vadd.f32 %v129, %v341
    %v343 = vpop.f32.mrb[0].mxu0
    %v344 = vadd.f32 %v133, %v343
    %345 = vmatprep.mubr.bf16.mxu0 0
    %346 = vmatmul.mubr.bf16.gmra.mrb[0].mxu0 %v159
    %v347 = vpop.f32.mrb[0].mxu0
    %v348 = vadd.f32 %v129, %v347
    %v349 = vpop.f32.mrb[0].mxu0
    %v350 = vadd.f32 %v133, %v349
    %v351 = vpop.f32.mrb[0].mxu0
    %v352 = vadd.f32 %v129, %v351
    %v353 = vpop.f32.mrb[0].mxu0
    %v354 = vadd.f32 %v133, %v353
    %355 = vmatprep.mubr.bf16.mxu0 0
    %356 = vmatmul.mubr.bf16.gmra.mrb[0].mxu0 %v160
    %v357 = vpop.f32.mrb[0].mxu0
    %v358 = vadd.f32 %v129, %v357
    %v359 = vpop.f32.mrb[0].mxu0
    %v360 = vadd.f32 %v133, %v359
    %v361 = vpop.f32.mrb[0].mxu0
    %v362 = vadd.f32 %v129, %v361
    %v363 = vpop.f32.mrb[0].mxu0
    %v364 = vadd.f32 %v133, %v363
    %365 = vdwg.mxu0
    %366 = vmatprep.subr.bf16.mxu0 0
    %367 = vmatpush1.bf16.msra.mxu0 %v247
    %368 = vmatprep.subr.bf16.mxu0 0
    %369 = vmatpush1.bf16.msra.mxu0 %v250
    %370 = vmatprep.subr.bf16.mxu0 0
    %371 = vmatpush1.bf16.msra.mxu0 %v253
    %372 = vmatprep.subr.bf16.mxu0 0
    %373 = vmatpush1.bf16.msra.mxu0 %v256
    %374 = vmatprep.subr.bf16.mxu0 0
    %375 = vmatpush1.bf16.msra.mxu0 %v259
    %376 = vmatprep.subr.bf16.mxu0 0
    %377 = vmatpush1.bf16.msra.mxu0 %v262
    %378 = vmatprep.subr.bf16.mxu0 0
    %379 = vmatpush1.bf16.msra.mxu0 %v265
    %380 = vmatprep.subr.bf16.mxu0 0
    %381 = vmatpush1.bf16.msra.mxu0 %v268
    %382 = vmatprep.subr.bf16.mxu0 0
    %383 = vmatpush1.bf16.msra.mxu0 0
    %384 = vmatprep.subr.bf16.mxu0 0
    %385 = vmatpush1.bf16.msra.mxu0 0
    %386 = vmatprep.subr.bf16.mxu0 0
    %387 = vmatpush1.bf16.msra.mxu0 0
    %388 = vmatprep.subr.bf16.mxu0 0
    %389 = vmatpush1.bf16.msra.mxu0 0
    %390 = vmatprep.subr.bf16.mxu0 0
    %391 = vmatpush1.bf16.msra.mxu0 0
    %392 = vmatprep.subr.bf16.mxu0 0
    %393 = vmatpush1.bf16.msra.mxu0 0
    %394 = vmatprep.subr.bf16.mxu0 0
    %395 = vmatpush1.bf16.msra.mxu0 0
    %396 = vmatprep.subr.bf16.mxu0 0
    %397 = vmatpush1.bf16.msra.mxu0 0
    %398 = vmatprep.mubr.bf16.mxu0 0
    %399 = vmatmul.mubr.bf16.gmra.mrb[0].mxu0 %v157
    %v400 = vpop.f32.mrb[0].mxu0
    %v401 = vadd.f32 %v137, %v400
    %v402 = vpop.f32.mrb[0].mxu0
    %v403 = vpop.f32.mrb[0].mxu0
    %v404 = vadd.f32 %v137, %v403
    %v405 = vpop.f32.mrb[0].mxu0
    %406 = vmatprep.mubr.bf16.mxu0 0
    %407 = vmatmul.mubr.bf16.gmra.mrb[0].mxu0 %v158
    %v408 = vpop.f32.mrb[0].mxu0
    %v409 = vadd.f32 %v137, %v408
    %v410 = vpop.f32.mrb[0].mxu0
    %v411 = vpop.f32.mrb[0].mxu0
    %v412 = vadd.f32 %v137, %v411
    %v413 = vpop.f32.mrb[0].mxu0
    %414 = vmatprep.mubr.bf16.mxu0 0
    %415 = vmatmul.mubr.bf16.gmra.mrb[0].mxu0 %v159
    %v416 = vpop.f32.mrb[0].mxu0
    %v417 = vadd.f32 %v137, %v416
    %v418 = vpop.f32.mrb[0].mxu0
    %v419 = vpop.f32.mrb[0].mxu0
    %v420 = vadd.f32 %v137, %v419
    %v421 = vpop.f32.mrb[0].mxu0
    %422 = vmatprep.mubr.bf16.mxu0 0
    %423 = vmatmul.mubr.bf16.gmra.mrb[0].mxu0 %v160
    %v424 = vpop.f32.mrb[0].mxu0
    %v425 = vadd.f32 %v137, %v424
    %v426 = vpop.f32.mrb[0].mxu0
    %v427 = vpop.f32.mrb[0].mxu0
    %v428 = vadd.f32 %v137, %v427
    %v429 = vpop.f32.mrb[0].mxu0
    %430 = vdwg.mxu0
    %431 = vst [vmem:[#allocation2] sm:$0xff] %v328
    %432 = vst [vmem:[#allocation2 + $0x8] sm:$0xff] %v330
    %433 = vst [vmem:[#allocation2 + $0x10] sm:$0xff] %v401
    %434 = vst [vmem:[#allocation2 + $0x18] sm:$0xff] %v332
    %435 = vst [vmem:[#allocation2 + $0x20] sm:$0xff] %v334
    %436 = vst [vmem:[#allocation2 + $0x28] sm:$0xff] %v404
    %437 = vst [vmem:[#allocation2 + $0x30] sm:$0xff] %v338
    %438 = vst [vmem:[#allocation2 + $0x38] sm:$0xff] %v340
    %439 = vst [vmem:[#allocation2 + $0x40] sm:$0xff] %v409
    %440 = vst [vmem:[#allocation2 + $0x48] sm:$0xff] %v342
    %441 = vst [vmem:[#allocation2 + $0x50] sm:$0xff] %v344
    %442 = vst [vmem:[#allocation2 + $0x58] sm:$0xff] %v412
    %443 = vst [vmem:[#allocation2 + $0x60] sm:$0xff] %v348
    %444 = vst [vmem:[#allocation2 + $0x68] sm:$0xff] %v350
    %445 = vst [vmem:[#allocation2 + $0x70] sm:$0xff] %v417
    %446 = vst [vmem:[#allocation2 + $0x78] sm:$0xff] %v352
    %447 = vst [vmem:[#allocation2 + $0x80] sm:$0xff] %v354
    %448 = vst [vmem:[#allocation2 + $0x88] sm:$0xff] %v420
    %449 = vst [vmem:[#allocation2 + $0x90] sm:$0xff] %v358
    %450 = vst [vmem:[#allocation2 + $0x98] sm:$0xff] %v360
    %451 = vst [vmem:[#allocation2 + $0xa0] sm:$0xff] %v425
    %452 = vst [vmem:[#allocation2 + $0xa8] sm:$0xff] %v362
    %453 = vst [vmem:[#allocation2 + $0xb0] sm:$0xff] %v364
    %454 = vst [vmem:[#allocation2 + $0xb8] sm:$0xff] %v428
    %v455 = vld [vmem:[%s5] sm:$0x1]
    %v457 = vlaneseq
    %v458 = vshrl.u32 %v457, 7
    %v459 = vsub.s32 0, %v458
    %v460 = vrot.slane %v455, %v459
    %v462 = vld [vmem:[#allocation11] sm:$0xff]
    %s463 = smul.u32 0, 3
    %s464 = smul.addr %s463, 8
    %s465 = scalar_lea.vmem [#allocation2], %s464
    %v466 = vld [vmem:[%s465] sm:$0xff]
    %v467 = vld [vmem:[%s465 + $0x8] sm:$0xff]
    %v468 = vld [vmem:[%s465 + $0x10] sm:$0xff]
    %v469 = vld [vmem:[#allocation9] sm:$0xff]
    %v470 = vld [vmem:[#allocation9 + $0x8] sm:$0xff]
    %v471 = vld [vmem:[#allocation9 + $0x10] sm:$0xff]
    %v472 = vld [vmem:[#allocation9 + $0x18] sm:$0xff]
    %v473 = vld [vmem:[#allocation9 + $0x20] sm:$0xff]
    %v474 = vld [vmem:[#allocation9 + $0x28] sm:$0xff]
    %v475 = vld [vmem:[#allocation9 + $0x30] sm:$0xff]
    %v476 = vld [vmem:[#allocation9 + $0x38] sm:$0xff]
    %v477 = vld [vmem:[#allocation9 + $0x40] sm:$0xff]
    %v478 = vld [vmem:[#allocation9 + $0x48] sm:$0xff]
    %v479 = vld [vmem:[#allocation9 + $0x50] sm:$0xff]
    %v480 = vld [vmem:[#allocation9 + $0x58] sm:$0xff]
    %v481 = vld [vmem:[#allocation9 + $0x60] sm:$0xff]
    %v482 = vld [vmem:[#allocation9 + $0x68] sm:$0xff]
    %v483 = vld [vmem:[#allocation9 + $0x70] sm:$0xff]
    %v484 = vld [vmem:[#allocation9 + $0x78] sm:$0xff]
    %v485 = vld [vmem:[#allocation9 + $0x80] sm:$0xff]
    %v486 = vld [vmem:[#allocation9 + $0x88] sm:$0xff]
    %v487 = vld [vmem:[#allocation9 + $0x90] sm:$0xff]
    %v488 = vld [vmem:[#allocation9 + $0x98] sm:$0xff]
    %v489 = vld [vmem:[#allocation9 + $0xa0] sm:$0xff]
    %v490 = vld [vmem:[#allocation9 + $0xa8] sm:$0xff]
    %v491 = vld [vmem:[#allocation9 + $0xb0] sm:$0xff]
    %v492 = vld [vmem:[#allocation9 + $0xb8] sm:$0xff]
    %v493 = vld [vmem:[#allocation9 + $0xc0] sm:$0xff]
    %v494 = vld [vmem:[#allocation9 + $0xc8] sm:$0xff]
    %v495 = vld [vmem:[#allocation9 + $0xd0] sm:$0xff]
    %v496 = vld [vmem:[#allocation9 + $0xd8] sm:$0xff]
    %v497 = vld [vmem:[#allocation9 + $0xe0] sm:$0xff]
    %v498 = vld [vmem:[#allocation9 + $0xe8] sm:$0xff]
    %v499 = vld [vmem:[#allocation9 + $0xf0] sm:$0xff]
    %v500 = vld [vmem:[#allocation9 + $0xf8] sm:$0xff]
    %v501 = vld [vmem:[#allocation9 + $0x100] sm:$0xff]
    %v502 = vld [vmem:[#allocation9 + $0x108] sm:$0xff]
    %v503 = vld [vmem:[#allocation9 + $0x110] sm:$0xff]
    %v504 = vld [vmem:[#allocation9 + $0x118] sm:$0xff]
    %v505 = vld [vmem:[#allocation9 + $0x120] sm:$0xff]
    %v506 = vld [vmem:[#allocation9 + $0x128] sm:$0xff]
    %v507 = vld [vmem:[#allocation9 + $0x130] sm:$0xff]
    %v508 = vld [vmem:[#allocation9 + $0x138] sm:$0xff]
    %v509 = vld [vmem:[#allocation9 + $0x140] sm:$0xff]
    %v510 = vld [vmem:[#allocation9 + $0x148] sm:$0xff]
    %v511 = vld [vmem:[#allocation9 + $0x150] sm:$0xff]
    %v512 = vld [vmem:[#allocation9 + $0x158] sm:$0xff]
    %v513 = vld [vmem:[#allocation9 + $0x160] sm:$0xff]
    %v514 = vld [vmem:[#allocation9 + $0x168] sm:$0xff]
    %v515 = vld [vmem:[#allocation9 + $0x170] sm:$0xff]
    %v516 = vld [vmem:[#allocation9 + $0x178] sm:$0xff]
    %517 = vmatprep.subr.mxu0 %v470
    %518 = vmatpush1.msra.mxu0 %v469
    %519 = vmatprep.subr.mxu0 %v473
    %520 = vmatpush1.msra.mxu0 %v472
    %521 = vmatprep.subr.mxu0 %v476
    %522 = vmatpush1.msra.mxu0 %v475
    %523 = vmatprep.subr.mxu0 %v479
    %524 = vmatpush1.msra.mxu0 %v478
    %525 = vmatprep.subr.mxu0 %v482
    %526 = vmatpush1.msra.mxu0 %v481
    %527 = vmatprep.subr.mxu0 %v485
    %528 = vmatpush1.msra.mxu0 %v484
    %529 = vmatprep.subr.mxu0 %v488
    %530 = vmatpush1.msra.mxu0 %v487
    %531 = vmatprep.subr.mxu0 %v491
    %532 = vmatpush1.msra.mxu0 %v490
    %533 = vmatprep.subr.mxu0 %v494
    %534 = vmatpush1.msra.mxu0 %v493
    %535 = vmatprep.subr.mxu0 %v497
    %536 = vmatpush1.msra.mxu0 %v496
    %537 = vmatprep.subr.mxu0 %v500
    %538 = vmatpush1.msra.mxu0 %v499
    %539 = vmatprep.subr.mxu0 %v503
    %540 = vmatpush1.msra.mxu0 %v502
    %541 = vmatprep.subr.mxu0 %v506
    %542 = vmatpush1.msra.mxu0 %v505
    %543 = vmatprep.subr.mxu0 %v509
    %544 = vmatpush1.msra.mxu0 %v508
    %545 = vmatprep.subr.mxu0 %v512
    %546 = vmatpush1.msra.mxu0 %v511
    %547 = vmatprep.subr.mxu0 %v515
    %548 = vmatpush1.msra.mxu0 %v514
    %549 = vmatprep.subr.mxu0 0.0
    %550 = vmatpush1.msra.mxu0 0.0
    %551 = vmatprep.subr.mxu0 0.0
    %552 = vmatpush1.msra.mxu0 0.0
    %553 = vmatprep.subr.mxu0 0.0
    %554 = vmatpush1.msra.mxu0 0.0
    %555 = vmatprep.subr.mxu0 0.0
    %556 = vmatpush1.msra.mxu0 0.0
    %557 = vmatprep.subr.mxu0 0.0
    %558 = vmatpush1.msra.mxu0 0.0
    %559 = vmatprep.subr.mxu0 0.0
    %560 = vmatpush1.msra.mxu0 0.0
    %561 = vmatprep.subr.mxu0 0.0
    %562 = vmatpush1.msra.mxu0 0.0
    %563 = vmatprep.subr.mxu0 0.0
    %564 = vmatpush1.msra.mxu0 0.0
    %565 = vmatprep.subr.mxu0 0.0
    %566 = vmatpush1.msra.mxu0 0.0
    %567 = vmatprep.subr.mxu0 0.0
    %568 = vmatpush1.msra.mxu0 0.0
    %569 = vmatprep.subr.mxu0 0.0
    %570 = vmatpush1.msra.mxu0 0.0
    %571 = vmatprep.subr.mxu0 0.0
    %572 = vmatpush1.msra.mxu0 0.0
    %573 = vmatprep.subr.mxu0 0.0
    %574 = vmatpush1.msra.mxu0 0.0
    %575 = vmatprep.subr.mxu0 0.0
    %576 = vmatpush1.msra.mxu0 0.0
    %577 = vmatprep.subr.mxu0 0.0
    %578 = vmatpush1.msra.mxu0 0.0
    %579 = vmatprep.subr.mxu0 0.0
    %580 = vmatpush1.msra.mxu0 0.0
    %581 = vmatprep.mubr.f32.mxu0 0.0
    %582 = vmatmul.mubr.f32.gmra.mrb[0].mxu0 %v462
    %v583 = vpop.f32.mrb[0].mxu0
    %v584 = vadd.f32 0.0, %v583
    %v585 = vpop.f32.mrb[0].mxu0
    %v586 = vadd.f32 0.0, %v585
    %587 = vdwg.mxu0
    %588 = vmatprep.subr.mxu0 0.0
    %589 = vmatpush1.msra.mxu0 %v471
    %590 = vmatprep.subr.mxu0 0.0
    %591 = vmatpush1.msra.mxu0 %v474
    %592 = vmatprep.subr.mxu0 0.0
    %593 = vmatpush1.msra.mxu0 %v477
    %594 = vmatprep.subr.mxu0 0.0
    %595 = vmatpush1.msra.mxu0 %v480
    %596 = vmatprep.subr.mxu0 0.0
    %597 = vmatpush1.msra.mxu0 %v483
    %598 = vmatprep.subr.mxu0 0.0
    %599 = vmatpush1.msra.mxu0 %v486
    %600 = vmatprep.subr.mxu0 0.0
    %601 = vmatpush1.msra.mxu0 %v489
    %602 = vmatprep.subr.mxu0 0.0
    %603 = vmatpush1.msra.mxu0 %v492
    %604 = vmatprep.subr.mxu0 0.0
    %605 = vmatpush1.msra.mxu0 %v495
    %606 = vmatprep.subr.mxu0 0.0
    %607 = vmatpush1.msra.mxu0 %v498
    %608 = vmatprep.subr.mxu0 0.0
    %609 = vmatpush1.msra.mxu0 %v501
    %610 = vmatprep.subr.mxu0 0.0
    %611 = vmatpush1.msra.mxu0 %v504
    %612 = vmatprep.subr.mxu0 0.0
    %613 = vmatpush1.msra.mxu0 %v507
    %614 = vmatprep.subr.mxu0 0.0
    %615 = vmatpush1.msra.mxu0 %v510
    %616 = vmatprep.subr.mxu0 0.0
    %617 = vmatpush1.msra.mxu0 %v513
    %618 = vmatprep.subr.mxu0 0.0
    %619 = vmatpush1.msra.mxu0 %v516
    %620 = vmatprep.subr.mxu0 0.0
    %621 = vmatpush1.msra.mxu0 0.0
    %622 = vmatprep.subr.mxu0 0.0
    %623 = vmatpush1.msra.mxu0 0.0
    %624 = vmatprep.subr.mxu0 0.0
    %625 = vmatpush1.msra.mxu0 0.0
    %626 = vmatprep.subr.mxu0 0.0
    %627 = vmatpush1.msra.mxu0 0.0
    %628 = vmatprep.subr.mxu0 0.0
    %629 = vmatpush1.msra.mxu0 0.0
    %630 = vmatprep.subr.mxu0 0.0
    %631 = vmatpush1.msra.mxu0 0.0
    %632 = vmatprep.subr.mxu0 0.0
    %633 = vmatpush1.msra.mxu0 0.0
    %634 = vmatprep.subr.mxu0 0.0
    %635 = vmatpush1.msra.mxu0 0.0
    %636 = vmatprep.subr.mxu0 0.0
    %637 = vmatpush1.msra.mxu0 0.0
    %638 = vmatprep.subr.mxu0 0.0
    %639 = vmatpush1.msra.mxu0 0.0
    %640 = vmatprep.subr.mxu0 0.0
    %641 = vmatpush1.msra.mxu0 0.0
    %642 = vmatprep.subr.mxu0 0.0
    %643 = vmatpush1.msra.mxu0 0.0
    %644 = vmatprep.subr.mxu0 0.0
    %645 = vmatpush1.msra.mxu0 0.0
    %646 = vmatprep.subr.mxu0 0.0
    %647 = vmatpush1.msra.mxu0 0.0
    %648 = vmatprep.subr.mxu0 0.0
    %649 = vmatpush1.msra.mxu0 0.0
    %650 = vmatprep.subr.mxu0 0.0
    %651 = vmatpush1.msra.mxu0 0.0
    %652 = vmatprep.mubr.f32.mxu0 0.0
    %653 = vmatmul.mubr.f32.gmra.mrb[0].mxu0 %v462
    %v654 = vpop.f32.mrb[0].mxu0
    %v655 = vadd.f32 0.0, %v654
    %v656 = vpop.f32.mrb[0].mxu0
    %657 = vdwg.mxu0
    %v658 = vadd.f32 %v466, %v584
    %v659 = vadd.f32 %v467, %v586
    %v660 = vxor.u32 %v658, 2147483648
    %v661 = vxor.u32 %v659, 2147483648
    %v662 = vmul.f32 %v660, 1.442695
    %v663 = vpow.pop %v662
    %v664 = vmul.f32 %v661, 1.442695
    %v665 = vpow.pop %v664
    %v666 = vadd.f32 %v663, 1.0
    %v667 = vadd.f32 %v665, 1.0
    %v668 = vrcp.pop %v666
    %v669 = vmul.f32 1.0, %v668
    %v670 = vrcp.pop %v667
    %v671 = vmul.f32 1.0, %v670
    %v672 = vadd.f32 %v655, %v460
    %v673 = vmul.f32 %v669, %v672
    %v674 = vadd.f32 %v468, %v673
    %v675 = vtanh.pop %v674
    %v676 = vsub.f32 1.0, %v671
    %v677 = vmul.f32 %v676, %v675
    %v678 = vmul.f32 %v671, %v462
    %v679 = vadd.f32 %v677, %v678
    %s680 = smul.u32 1, 3
    %s681 = smul.addr %s680, 8
    %s682 = scalar_lea.vmem [#allocation2], %s681
    %v683 = vld [vmem:[%s682] sm:$0xff]
    %v684 = vld [vmem:[%s682 + $0x8] sm:$0xff]
    %v685 = vld [vmem:[%s682 + $0x10] sm:$0xff]
    %686 = vmatprep.subr.mxu0 %v470
    %687 = vmatpush1.msra.mxu0 %v469
    %688 = vmatprep.subr.mxu0 %v473
    %689 = vmatpush1.msra.mxu0 %v472
    %690 = vmatprep.subr.mxu0 %v476
    %691 = vmatpush1.msra.mxu0 %v475
    %692 = vmatprep.subr.mxu0 %v479
    %693 = vmatpush1.msra.mxu0 %v478
    %694 = vmatprep.subr.mxu0 %v482
    %695 = vmatpush1.msra.mxu0 %v481
    %696 = vmatprep.subr.mxu0 %v485
    %697 = vmatpush1.msra.mxu0 %v484
    %698 = vmatprep.subr.mxu0 %v488
    %699 = vmatpush1.msra.mxu0 %v487
    %700 = vmatprep.subr.mxu0 %v491
    %701 = vmatpush1.msra.mxu0 %v490
    %702 = vmatprep.subr.mxu0 %v494
    %703 = vmatpush1.msra.mxu0 %v493
    %704 = vmatprep.subr.mxu0 %v497
    %705 = vmatpush1.msra.mxu0 %v496
    %706 = vmatprep.subr.mxu0 %v500
    %707 = vmatpush1.msra.mxu0 %v499
    %708 = vmatprep.subr.mxu0 %v503
    %709 = vmatpush1.msra.mxu0 %v502
    %710 = vmatprep.subr.mxu0 %v506
    %711 = vmatpush1.msra.mxu0 %v505
    %712 = vmatprep.subr.mxu0 %v509
    %713 = vmatpush1.msra.mxu0 %v508
    %714 = vmatprep.subr.mxu0 %v512
    %715 = vmatpush1.msra.mxu0 %v511
    %716 = vmatprep.subr.mxu0 %v515
    %717 = vmatpush1.msra.mxu0 %v514
    %718 = vmatprep.subr.mxu0 0.0
    %719 = vmatpush1.msra.mxu0 0.0
    %720 = vmatprep.subr.mxu0 0.0
    %721 = vmatpush1.msra.mxu0 0.0
    %722 = vmatprep.subr.mxu0 0.0
    %723 = vmatpush1.msra.mxu0 0.0
    %724 = vmatprep.subr.mxu0 0.0
    %725 = vmatpush1.msra.mxu0 0.0
    %726 = vmatprep.subr.mxu0 0.0
    %727 = vmatpush1.msra.mxu0 0.0
    %728 = vmatprep.subr.mxu0 0.0
    %729 = vmatpush1.msra.mxu0 0.0
    %730 = vmatprep.subr.mxu0 0.0
    %731 = vmatpush1.msra.mxu0 0.0
    %732 = vmatprep.subr.mxu0 0.0
    %733 = vmatpush1.msra.mxu0 0.0
    %734 = vmatprep.subr.mxu0 0.0
    %735 = vmatpush1.msra.mxu0 0.0
    %736 = vmatprep.subr.mxu0 0.0
    %737 = vmatpush1.msra.mxu0 0.0
    %738 = vmatprep.subr.mxu0 0.0
    %739 = vmatpush1.msra.mxu0 0.0
    %740 = vmatprep.subr.mxu0 0.0
    %741 = vmatpush1.msra.mxu0 0.0
    %742 = vmatprep.subr.mxu0 0.0
    %743 = vmatpush1.msra.mxu0 0.0
    %744 = vmatprep.subr.mxu0 0.0
    %745 = vmatpush1.msra.mxu0 0.0
    %746 = vmatprep.subr.mxu0 0.0
    %747 = vmatpush1.msra.mxu0 0.0
    %748 = vmatprep.subr.mxu0 0.0
    %749 = vmatpush1.msra.mxu0 0.0
    %750 = vmatprep.mubr.f32.mxu0 0.0
    %751 = vmatmul.mubr.f32.gmra.mrb[0].mxu0 %v679
    %v752 = vpop.f32.mrb[0].mxu0
    %v753 = vadd.f32 0.0, %v752
    %v754 = vpop.f32.mrb[0].mxu0
    %v755 = vadd.f32 0.0, %v754
    %756 = vdwg.mxu0
    %757 = vmatprep.subr.mxu0 0.0
    %758 = vmatpush1.msra.mxu0 %v471
    %759 = vmatprep.subr.mxu0 0.0
    %760 = vmatpush1.msra.mxu0 %v474
    %761 = vmatprep.subr.mxu0 0.0
    %762 = vmatpush1.msra.mxu0 %v477
    %763 = vmatprep.subr.mxu0 0.0
    %764 = vmatpush1.msra.mxu0 %v480
    %765 = vmatprep.subr.mxu0 0.0
    %766 = vmatpush1.msra.mxu0 %v483
    %767 = vmatprep.subr.mxu0 0.0
    %768 = vmatpush1.msra.mxu0 %v486
    %769 = vmatprep.subr.mxu0 0.0
    %770 = vmatpush1.msra.mxu0 %v489
    %771 = vmatprep.subr.mxu0 0.0
    %772 = vmatpush1.msra.mxu0 %v492
    %773 = vmatprep.subr.mxu0 0.0
    %774 = vmatpush1.msra.mxu0 %v495
    %775 = vmatprep.subr.mxu0 0.0
    %776 = vmatpush1.msra.mxu0 %v498
    %777 = vmatprep.subr.mxu0 0.0
    %778 = vmatpush1.msra.mxu0 %v501
    %779 = vmatprep.subr.mxu0 0.0
    %780 = vmatpush1.msra.mxu0 %v504
    %781 = vmatprep.subr.mxu0 0.0
    %782 = vmatpush1.msra.mxu0 %v507
    %783 = vmatprep.subr.mxu0 0.0
    %784 = vmatpush1.msra.mxu0 %v510
    %785 = vmatprep.subr.mxu0 0.0
    %786 = vmatpush1.msra.mxu0 %v513
    %787 = vmatprep.subr.mxu0 0.0
    %788 = vmatpush1.msra.mxu0 %v516
    %789 = vmatprep.subr.mxu0 0.0
    %790 = vmatpush1.msra.mxu0 0.0
    %791 = vmatprep.subr.mxu0 0.0
    %792 = vmatpush1.msra.mxu0 0.0
    %793 = vmatprep.subr.mxu0 0.0
    %794 = vmatpush1.msra.mxu0 0.0
    %795 = vmatprep.subr.mxu0 0.0
    %796 = vmatpush1.msra.mxu0 0.0
    %797 = vmatprep.subr.mxu0 0.0
    %798 = vmatpush1.msra.mxu0 0.0
    %799 = vmatprep.subr.mxu0 0.0
    %800 = vmatpush1.msra.mxu0 0.0
    %801 = vmatprep.subr.mxu0 0.0
    %802 = vmatpush1.msra.mxu0 0.0
    %803 = vmatprep.subr.mxu0 0.0
    %804 = vmatpush1.msra.mxu0 0.0
    %805 = vmatprep.subr.mxu0 0.0
    %806 = vmatpush1.msra.mxu0 0.0
    %807 = vmatprep.subr.mxu0 0.0
    %808 = vmatpush1.msra.mxu0 0.0
    %809 = vmatprep.subr.mxu0 0.0
    %810 = vmatpush1.msra.mxu0 0.0
    %811 = vmatprep.subr.mxu0 0.0
    %812 = vmatpush1.msra.mxu0 0.0
    %813 = vmatprep.subr.mxu0 0.0
    %814 = vmatpush1.msra.mxu0 0.0
    %815 = vmatprep.subr.mxu0 0.0
    %816 = vmatpush1.msra.mxu0 0.0
    %817 = vmatprep.subr.mxu0 0.0
    %818 = vmatpush1.msra.mxu0 0.0
    %819 = vmatprep.subr.mxu0 0.0
    %820 = vmatpush1.msra.mxu0 0.0
    %821 = vmatprep.mubr.f32.mxu0 0.0
    %822 = vmatmul.mubr.f32.gmra.mrb[0].mxu0 %v679
    %v823 = vpop.f32.mrb[0].mxu0
    %v824 = vadd.f32 0.0, %v823
    %v825 = vpop.f32.mrb[0].mxu0
    %826 = vdwg.mxu0
    %v827 = vadd.f32 %v683, %v753
    %v828 = vadd.f32 %v684, %v755
    %v829 = vxor.u32 %v827, 2147483648
    %v830 = vxor.u32 %v828, 2147483648
    %v831 = vmul.f32 %v829, 1.442695
    %v832 = vpow.pop %v831
    %v833 = vmul.f32 %v830, 1.442695
    %v834 = vpow.pop %v833
    %v835 = vadd.f32 %v832, 1.0
    %v836 = vadd.f32 %v834, 1.0
    %v837 = vrcp.pop %v835
    %v838 = vmul.f32 1.0, %v837
    %v839 = vrcp.pop %v836
    %v840 = vmul.f32 1.0, %v839
    %v841 = vadd.f32 %v824, %v460
    %v842 = vmul.f32 %v838, %v841
    %v843 = vadd.f32 %v685, %v842
    %v844 = vtanh.pop %v843
    %v845 = vsub.f32 1.0, %v840
    %v846 = vmul.f32 %v845, %v844
    %v847 = vmul.f32 %v840, %v679
    %v848 = vadd.f32 %v846, %v847
    %s849 = smul.u32 2, 3
    %s850 = smul.addr %s849, 8
    %s851 = scalar_lea.vmem [#allocation2], %s850
    %v852 = vld [vmem:[%s851] sm:$0xff]
    %v853 = vld [vmem:[%s851 + $0x8] sm:$0xff]
    %v854 = vld [vmem:[%s851 + $0x10] sm:$0xff]
    %855 = vmatprep.subr.mxu0 %v470
    %856 = vmatpush1.msra.mxu0 %v469
    %857 = vmatprep.subr.mxu0 %v473
    %858 = vmatpush1.msra.mxu0 %v472
    %859 = vmatprep.subr.mxu0 %v476
    %860 = vmatpush1.msra.mxu0 %v475
    %861 = vmatprep.subr.mxu0 %v479
    %862 = vmatpush1.msra.mxu0 %v478
    %863 = vmatprep.subr.mxu0 %v482
    %864 = vmatpush1.msra.mxu0 %v481
    %865 = vmatprep.subr.mxu0 %v485
    %866 = vmatpush1.msra.mxu0 %v484
    %867 = vmatprep.subr.mxu0 %v488
    %868 = vmatpush1.msra.mxu0 %v487
    %869 = vmatprep.subr.mxu0 %v491
    %870 = vmatpush1.msra.mxu0 %v490
    %871 = vmatprep.subr.mxu0 %v494
    %872 = vmatpush1.msra.mxu0 %v493
    %873 = vmatprep.subr.mxu0 %v497
    %874 = vmatpush1.msra.mxu0 %v496
    %875 = vmatprep.subr.mxu0 %v500
    %876 = vmatpush1.msra.mxu0 %v499
    %877 = vmatprep.subr.mxu0 %v503
    %878 = vmatpush1.msra.mxu0 %v502
    %879 = vmatprep.subr.mxu0 %v506
    %880 = vmatpush1.msra.mxu0 %v505
    %881 = vmatprep.subr.mxu0 %v509
    %882 = vmatpush1.msra.mxu0 %v508
    %883 = vmatprep.subr.mxu0 %v512
    %884 = vmatpush1.msra.mxu0 %v511
    %885 = vmatprep.subr.mxu0 %v515
    %886 = vmatpush1.msra.mxu0 %v514
    %887 = vmatprep.subr.mxu0 0.0
    %888 = vmatpush1.msra.mxu0 0.0
    %889 = vmatprep.subr.mxu0 0.0
    %890 = vmatpush1.msra.mxu0 0.0
    %891 = vmatprep.subr.mxu0 0.0
    %892 = vmatpush1.msra.mxu0 0.0
    %893 = vmatprep.subr.mxu0 0.0
    %894 = vmatpush1.msra.mxu0 0.0
    %895 = vmatprep.subr.mxu0 0.0
    %896 = vmatpush1.msra.mxu0 0.0
    %897 = vmatprep.subr.mxu0 0.0
    %898 = vmatpush1.msra.mxu0 0.0
    %899 = vmatprep.subr.mxu0 0.0
    %900 = vmatpush1.msra.mxu0 0.0
    %901 = vmatprep.subr.mxu0 0.0
    %902 = vmatpush1.msra.mxu0 0.0
    %903 = vmatprep.subr.mxu0 0.0
    %904 = vmatpush1.msra.mxu0 0.0
    %905 = vmatprep.subr.mxu0 0.0
    %906 = vmatpush1.msra.mxu0 0.0
    %907 = vmatprep.subr.mxu0 0.0
    %908 = vmatpush1.msra.mxu0 0.0
    %909 = vmatprep.subr.mxu0 0.0
    %910 = vmatpush1.msra.mxu0 0.0
    %911 = vmatprep.subr.mxu0 0.0
    %912 = vmatpush1.msra.mxu0 0.0
    %913 = vmatprep.subr.mxu0 0.0
    %914 = vmatpush1.msra.mxu0 0.0
    %915 = vmatprep.subr.mxu0 0.0
    %916 = vmatpush1.msra.mxu0 0.0
    %917 = vmatprep.subr.mxu0 0.0
    %918 = vmatpush1.msra.mxu0 0.0
    %919 = vmatprep.mubr.f32.mxu0 0.0
    %920 = vmatmul.mubr.f32.gmra.mrb[0].mxu0 %v848
    %v921 = vpop.f32.mrb[0].mxu0
    %v922 = vadd.f32 0.0, %v921
    %v923 = vpop.f32.mrb[0].mxu0
    %v924 = vadd.f32 0.0, %v923
    %925 = vdwg.mxu0
    %926 = vmatprep.subr.mxu0 0.0
    %927 = vmatpush1.msra.mxu0 %v471
    %928 = vmatprep.subr.mxu0 0.0
    %929 = vmatpush1.msra.mxu0 %v474
    %930 = vmatprep.subr.mxu0 0.0
    %931 = vmatpush1.msra.mxu0 %v477
    %932 = vmatprep.subr.mxu0 0.0
    %933 = vmatpush1.msra.mxu0 %v480
    %934 = vmatprep.subr.mxu0 0.0
    %935 = vmatpush1.msra.mxu0 %v483
    %936 = vmatprep.subr.mxu0 0.0
    %937 = vmatpush1.msra.mxu0 %v486
    %938 = vmatprep.subr.mxu0 0.0
    %939 = vmatpush1.msra.mxu0 %v489
    %940 = vmatprep.subr.mxu0 0.0
    %941 = vmatpush1.msra.mxu0 %v492
    %942 = vmatprep.subr.mxu0 0.0
    %943 = vmatpush1.msra.mxu0 %v495
    %944 = vmatprep.subr.mxu0 0.0
    %945 = vmatpush1.msra.mxu0 %v498
    %946 = vmatprep.subr.mxu0 0.0
    %947 = vmatpush1.msra.mxu0 %v501
    %948 = vmatprep.subr.mxu0 0.0
    %949 = vmatpush1.msra.mxu0 %v504
    %950 = vmatprep.subr.mxu0 0.0
    %951 = vmatpush1.msra.mxu0 %v507
    %952 = vmatprep.subr.mxu0 0.0
    %953 = vmatpush1.msra.mxu0 %v510
    %954 = vmatprep.subr.mxu0 0.0
    %955 = vmatpush1.msra.mxu0 %v513
    %956 = vmatprep.subr.mxu0 0.0
    %957 = vmatpush1.msra.mxu0 %v516
    %958 = vmatprep.subr.mxu0 0.0
    %959 = vmatpush1.msra.mxu0 0.0
    %960 = vmatprep.subr.mxu0 0.0
    %961 = vmatpush1.msra.mxu0 0.0
    %962 = vmatprep.subr.mxu0 0.0
    %963 = vmatpush1.msra.mxu0 0.0
    %964 = vmatprep.subr.mxu0 0.0
    %965 = vmatpush1.msra.mxu0 0.0
    %966 = vmatprep.subr.mxu0 0.0
    %967 = vmatpush1.msra.mxu0 0.0
    %968 = vmatprep.subr.mxu0 0.0
    %969 = vmatpush1.msra.mxu0 0.0
    %970 = vmatprep.subr.mxu0 0.0
    %971 = vmatpush1.msra.mxu0 0.0
    %972 = vmatprep.subr.mxu0 0.0
    %973 = vmatpush1.msra.mxu0 0.0
    %974 = vmatprep.subr.mxu0 0.0
    %975 = vmatpush1.msra.mxu0 0.0
    %976 = vmatprep.subr.mxu0 0.0
    %977 = vmatpush1.msra.mxu0 0.0
    %978 = vmatprep.subr.mxu0 0.0
    %979 = vmatpush1.msra.mxu0 0.0
    %980 = vmatprep.subr.mxu0 0.0
    %981 = vmatpush1.msra.mxu0 0.0
    %982 = vmatprep.subr.mxu0 0.0
    %983 = vmatpush1.msra.mxu0 0.0
    %984 = vmatprep.subr.mxu0 0.0
    %985 = vmatpush1.msra.mxu0 0.0
    %986 = vmatprep.subr.mxu0 0.0
    %987 = vmatpush1.msra.mxu0 0.0
    %988 = vmatprep.subr.mxu0 0.0
    %989 = vmatpush1.msra.mxu0 0.0
    %990 = vmatprep.mubr.f32.mxu0 0.0
    %991 = vmatmul.mubr.f32.gmra.mrb[0].mxu0 %v848
    %v992 = vpop.f32.mrb[0].mxu0
    %v993 = vadd.f32 0.0, %v992
    %v994 = vpop.f32.mrb[0].mxu0
    %995 = vdwg.mxu0
    %v996 = vadd.f32 %v852, %v922
    %v997 = vadd.f32 %v853, %v924
    %v998 = vxor.u32 %v996, 2147483648
    %v999 = vxor.u32 %v997, 2147483648
    %v1000 = vmul.f32 %v998, 1.442695
    %v1001 = vpow.pop %v1000
    %v1002 = vmul.f32 %v999, 1.442695
    %v1003 = vpow.pop %v1002
    %v1004 = vadd.f32 %v1001, 1.0
    %v1005 = vadd.f32 %v1003, 1.0
    %v1006 = vrcp.pop %v1004
    %v1007 = vmul.f32 1.0, %v1006
    %v1008 = vrcp.pop %v1005
    %v1009 = vmul.f32 1.0, %v1008
    %v1010 = vadd.f32 %v993, %v460
    %v1011 = vmul.f32 %v1007, %v1010
    %v1012 = vadd.f32 %v854, %v1011
    %v1013 = vtanh.pop %v1012
    %v1014 = vsub.f32 1.0, %v1009
    %v1015 = vmul.f32 %v1014, %v1013
    %v1016 = vmul.f32 %v1009, %v848
    %v1017 = vadd.f32 %v1015, %v1016
    %s1018 = smul.u32 3, 3
    %s1019 = smul.addr %s1018, 8
    %s1020 = scalar_lea.vmem [#allocation2], %s1019
    %v1021 = vld [vmem:[%s1020] sm:$0xff]
    %v1022 = vld [vmem:[%s1020 + $0x8] sm:$0xff]
    %v1023 = vld [vmem:[%s1020 + $0x10] sm:$0xff]
    %1024 = vmatprep.subr.mxu0 %v470
    %1025 = vmatpush1.msra.mxu0 %v469
    %1026 = vmatprep.subr.mxu0 %v473
    %1027 = vmatpush1.msra.mxu0 %v472
    %1028 = vmatprep.subr.mxu0 %v476
    %1029 = vmatpush1.msra.mxu0 %v475
    %1030 = vmatprep.subr.mxu0 %v479
    %1031 = vmatpush1.msra.mxu0 %v478
    %1032 = vmatprep.subr.mxu0 %v482
    %1033 = vmatpush1.msra.mxu0 %v481
    %1034 = vmatprep.subr.mxu0 %v485
    %1035 = vmatpush1.msra.mxu0 %v484
    %1036 = vmatprep.subr.mxu0 %v488
    %1037 = vmatpush1.msra.mxu0 %v487
    %1038 = vmatprep.subr.mxu0 %v491
    %1039 = vmatpush1.msra.mxu0 %v490
    %1040 = vmatprep.subr.mxu0 %v494
    %1041 = vmatpush1.msra.mxu0 %v493
    %1042 = vmatprep.subr.mxu0 %v497
    %1043 = vmatpush1.msra.mxu0 %v496
    %1044 = vmatprep.subr.mxu0 %v500
    %1045 = vmatpush1.msra.mxu0 %v499
    %1046 = vmatprep.subr.mxu0 %v503
    %1047 = vmatpush1.msra.mxu0 %v502
    %1048 = vmatprep.subr.mxu0 %v506
    %1049 = vmatpush1.msra.mxu0 %v505
    %1050 = vmatprep.subr.mxu0 %v509
    %1051 = vmatpush1.msra.mxu0 %v508
    %1052 = vmatprep.subr.mxu0 %v512
    %1053 = vmatpush1.msra.mxu0 %v511
    %1054 = vmatprep.subr.mxu0 %v515
    %1055 = vmatpush1.msra.mxu0 %v514
    %1056 = vmatprep.subr.mxu0 0.0
    %1057 = vmatpush1.msra.mxu0 0.0
    %1058 = vmatprep.subr.mxu0 0.0
    %1059 = vmatpush1.msra.mxu0 0.0
    %1060 = vmatprep.subr.mxu0 0.0
    %1061 = vmatpush1.msra.mxu0 0.0
    %1062 = vmatprep.subr.mxu0 0.0
    %1063 = vmatpush1.msra.mxu0 0.0
    %1064 = vmatprep.subr.mxu0 0.0
    %1065 = vmatpush1.msra.mxu0 0.0
    %1066 = vmatprep.subr.mxu0 0.0
    %1067 = vmatpush1.msra.mxu0 0.0
    %1068 = vmatprep.subr.mxu0 0.0
    %1069 = vmatpush1.msra.mxu0 0.0
    %1070 = vmatprep.subr.mxu0 0.0
    %1071 = vmatpush1.msra.mxu0 0.0
    %1072 = vmatprep.subr.mxu0 0.0
    %1073 = vmatpush1.msra.mxu0 0.0
    %1074 = vmatprep.subr.mxu0 0.0
    %1075 = vmatpush1.msra.mxu0 0.0
    %1076 = vmatprep.subr.mxu0 0.0
    %1077 = vmatpush1.msra.mxu0 0.0
    %1078 = vmatprep.subr.mxu0 0.0
    %1079 = vmatpush1.msra.mxu0 0.0
    %1080 = vmatprep.subr.mxu0 0.0
    %1081 = vmatpush1.msra.mxu0 0.0
    %1082 = vmatprep.subr.mxu0 0.0
    %1083 = vmatpush1.msra.mxu0 0.0
    %1084 = vmatprep.subr.mxu0 0.0
    %1085 = vmatpush1.msra.mxu0 0.0
    %1086 = vmatprep.subr.mxu0 0.0
    %1087 = vmatpush1.msra.mxu0 0.0
    %1088 = vmatprep.mubr.f32.mxu0 0.0
    %1089 = vmatmul.mubr.f32.gmra.mrb[0].mxu0 %v1017
    %v1090 = vpop.f32.mrb[0].mxu0
    %v1091 = vadd.f32 0.0, %v1090
    %v1092 = vpop.f32.mrb[0].mxu0
    %v1093 = vadd.f32 0.0, %v1092
    %1094 = vdwg.mxu0
    %1095 = vmatprep.subr.mxu0 0.0
    %1096 = vmatpush1.msra.mxu0 %v471
    %1097 = vmatprep.subr.mxu0 0.0
    %1098 = vmatpush1.msra.mxu0 %v474
    %1099 = vmatprep.subr.mxu0 0.0
    %1100 = vmatpush1.msra.mxu0 %v477
    %1101 = vmatprep.subr.mxu0 0.0
    %1102 = vmatpush1.msra.mxu0 %v480
    %1103 = vmatprep.subr.mxu0 0.0
    %1104 = vmatpush1.msra.mxu0 %v483
    %1105 = vmatprep.subr.mxu0 0.0
    %1106 = vmatpush1.msra.mxu0 %v486
    %1107 = vmatprep.subr.mxu0 0.0
    %1108 = vmatpush1.msra.mxu0 %v489
    %1109 = vmatprep.subr.mxu0 0.0
    %1110 = vmatpush1.msra.mxu0 %v492
    %1111 = vmatprep.subr.mxu0 0.0
    %1112 = vmatpush1.msra.mxu0 %v495
    %1113 = vmatprep.subr.mxu0 0.0
    %1114 = vmatpush1.msra.mxu0 %v498
    %1115 = vmatprep.subr.mxu0 0.0
    %1116 = vmatpush1.msra.mxu0 %v501
    %1117 = vmatprep.subr.mxu0 0.0
    %1118 = vmatpush1.msra.mxu0 %v504
    %1119 = vmatprep.subr.mxu0 0.0
    %1120 = vmatpush1.msra.mxu0 %v507
    %1121 = vmatprep.subr.mxu0 0.0
    %1122 = vmatpush1.msra.mxu0 %v510
    %1123 = vmatprep.subr.mxu0 0.0
    %1124 = vmatpush1.msra.mxu0 %v513
    %1125 = vmatprep.subr.mxu0 0.0
    %1126 = vmatpush1.msra.mxu0 %v516
    %1127 = vmatprep.subr.mxu0 0.0
    %1128 = vmatpush1.msra.mxu0 0.0
    %1129 = vmatprep.subr.mxu0 0.0
    %1130 = vmatpush1.msra.mxu0 0.0
    %1131 = vmatprep.subr.mxu0 0.0
    %1132 = vmatpush1.msra.mxu0 0.0
    %1133 = vmatprep.subr.mxu0 0.0
    %1134 = vmatpush1.msra.mxu0 0.0
    %1135 = vmatprep.subr.mxu0 0.0
    %1136 = vmatpush1.msra.mxu0 0.0
    %1137 = vmatprep.subr.mxu0 0.0
    %1138 = vmatpush1.msra.mxu0 0.0
    %1139 = vmatprep.subr.mxu0 0.0
    %1140 = vmatpush1.msra.mxu0 0.0
    %1141 = vmatprep.subr.mxu0 0.0
    %1142 = vmatpush1.msra.mxu0 0.0
    %1143 = vmatprep.subr.mxu0 0.0
    %1144 = vmatpush1.msra.mxu0 0.0
    %1145 = vmatprep.subr.mxu0 0.0
    %1146 = vmatpush1.msra.mxu0 0.0
    %1147 = vmatprep.subr.mxu0 0.0
    %1148 = vmatpush1.msra.mxu0 0.0
    %1149 = vmatprep.subr.mxu0 0.0
    %1150 = vmatpush1.msra.mxu0 0.0
    %1151 = vmatprep.subr.mxu0 0.0
    %1152 = vmatpush1.msra.mxu0 0.0
    %1153 = vmatprep.subr.mxu0 0.0
    %1154 = vmatpush1.msra.mxu0 0.0
    %1155 = vmatprep.subr.mxu0 0.0
    %1156 = vmatpush1.msra.mxu0 0.0
    %1157 = vmatprep.subr.mxu0 0.0
    %1158 = vmatpush1.msra.mxu0 0.0
    %1159 = vmatprep.mubr.f32.mxu0 0.0
    %1160 = vmatmul.mubr.f32.gmra.mrb[0].mxu0 %v1017
    %v1161 = vpop.f32.mrb[0].mxu0
    %v1162 = vadd.f32 0.0, %v1161
    %v1163 = vpop.f32.mrb[0].mxu0
    %1164 = vdwg.mxu0
    %v1165 = vadd.f32 %v1021, %v1091
    %v1166 = vadd.f32 %v1022, %v1093
    %v1167 = vxor.u32 %v1165, 2147483648
    %v1168 = vxor.u32 %v1166, 2147483648
    %v1169 = vmul.f32 %v1167, 1.442695
    %v1170 = vpow.pop %v1169
    %v1171 = vmul.f32 %v1168, 1.442695
    %v1172 = vpow.pop %v1171
    %v1173 = vadd.f32 %v1170, 1.0
    %v1174 = vadd.f32 %v1172, 1.0
    %v1175 = vrcp.pop %v1173
    %v1176 = vmul.f32 1.0, %v1175
    %v1177 = vrcp.pop %v1174
    %v1178 = vmul.f32 1.0, %v1177
    %v1179 = vadd.f32 %v1162, %v460
    %v1180 = vmul.f32 %v1176, %v1179
    %v1181 = vadd.f32 %v1023, %v1180
    %v1182 = vtanh.pop %v1181
    %v1183 = vsub.f32 1.0, %v1178
    %v1184 = vmul.f32 %v1183, %v1182
    %v1185 = vmul.f32 %v1178, %v1017
    %v1186 = vadd.f32 %v1184, %v1185
    %s1187 = smul.u32 4, 3
    %s1188 = smul.addr %s1187, 8
    %s1189 = scalar_lea.vmem [#allocation2], %s1188
    %v1190 = vld [vmem:[%s1189] sm:$0xff]
    %v1191 = vld [vmem:[%s1189 + $0x8] sm:$0xff]
    %v1192 = vld [vmem:[%s1189 + $0x10] sm:$0xff]
    %1193 = vmatprep.subr.mxu0 %v470
    %1194 = vmatpush1.msra.mxu0 %v469
    %1195 = vmatprep.subr.mxu0 %v473
    %1196 = vmatpush1.msra.mxu0 %v472
    %1197 = vmatprep.subr.mxu0 %v476
    %1198 = vmatpush1.msra.mxu0 %v475
    %1199 = vmatprep.subr.mxu0 %v479
    %1200 = vmatpush1.msra.mxu0 %v478
    %1201 = vmatprep.subr.mxu0 %v482
    %1202 = vmatpush1.msra.mxu0 %v481
    %1203 = vmatprep.subr.mxu0 %v485
    %1204 = vmatpush1.msra.mxu0 %v484
    %1205 = vmatprep.subr.mxu0 %v488
    %1206 = vmatpush1.msra.mxu0 %v487
    %1207 = vmatprep.subr.mxu0 %v491
    %1208 = vmatpush1.msra.mxu0 %v490
    %1209 = vmatprep.subr.mxu0 %v494
    %1210 = vmatpush1.msra.mxu0 %v493
    %1211 = vmatprep.subr.mxu0 %v497
    %1212 = vmatpush1.msra.mxu0 %v496
    %1213 = vmatprep.subr.mxu0 %v500
    %1214 = vmatpush1.msra.mxu0 %v499
    %1215 = vmatprep.subr.mxu0 %v503
    %1216 = vmatpush1.msra.mxu0 %v502
    %1217 = vmatprep.subr.mxu0 %v506
    %1218 = vmatpush1.msra.mxu0 %v505
    %1219 = vmatprep.subr.mxu0 %v509
    %1220 = vmatpush1.msra.mxu0 %v508
    %1221 = vmatprep.subr.mxu0 %v512
    %1222 = vmatpush1.msra.mxu0 %v511
    %1223 = vmatprep.subr.mxu0 %v515
    %1224 = vmatpush1.msra.mxu0 %v514
    %1225 = vmatprep.subr.mxu0 0.0
    %1226 = vmatpush1.msra.mxu0 0.0
    %1227 = vmatprep.subr.mxu0 0.0
    %1228 = vmatpush1.msra.mxu0 0.0
    %1229 = vmatprep.subr.mxu0 0.0
    %1230 = vmatpush1.msra.mxu0 0.0
    %1231 = vmatprep.subr.mxu0 0.0
    %1232 = vmatpush1.msra.mxu0 0.0
    %1233 = vmatprep.subr.mxu0 0.0
    %1234 = vmatpush1.msra.mxu0 0.0
    %1235 = vmatprep.subr.mxu0 0.0
    %1236 = vmatpush1.msra.mxu0 0.0
    %1237 = vmatprep.subr.mxu0 0.0
    %1238 = vmatpush1.msra.mxu0 0.0
    %1239 = vmatprep.subr.mxu0 0.0
    %1240 = vmatpush1.msra.mxu0 0.0
    %1241 = vmatprep.subr.mxu0 0.0
    %1242 = vmatpush1.msra.mxu0 0.0
    %1243 = vmatprep.subr.mxu0 0.0
    %1244 = vmatpush1.msra.mxu0 0.0
    %1245 = vmatprep.subr.mxu0 0.0
    %1246 = vmatpush1.msra.mxu0 0.0
    %1247 = vmatprep.subr.mxu0 0.0
    %1248 = vmatpush1.msra.mxu0 0.0
    %1249 = vmatprep.subr.mxu0 0.0
    %1250 = vmatpush1.msra.mxu0 0.0
    %1251 = vmatprep.subr.mxu0 0.0
    %1252 = vmatpush1.msra.mxu0 0.0
    %1253 = vmatprep.subr.mxu0 0.0
    %1254 = vmatpush1.msra.mxu0 0.0
    %1255 = vmatprep.subr.mxu0 0.0
    %1256 = vmatpush1.msra.mxu0 0.0
    %1257 = vmatprep.mubr.f32.mxu0 0.0
    %1258 = vmatmul.mubr.f32.gmra.mrb[0].mxu0 %v1186
    %v1259 = vpop.f32.mrb[0].mxu0
    %v1260 = vadd.f32 0.0, %v1259
    %v1261 = vpop.f32.mrb[0].mxu0
    %v1262 = vadd.f32 0.0, %v1261
    %1263 = vdwg.mxu0
    %1264 = vmatprep.subr.mxu0 0.0
    %1265 = vmatpush1.msra.mxu0 %v471
    %1266 = vmatprep.subr.mxu0 0.0
    %1267 = vmatpush1.msra.mxu0 %v474
    %1268 = vmatprep.subr.mxu0 0.0
    %1269 = vmatpush1.msra.mxu0 %v477
    %1270 = vmatprep.subr.mxu0 0.0
    %1271 = vmatpush1.msra.mxu0 %v480
    %1272 = vmatprep.subr.mxu0 0.0
    %1273 = vmatpush1.msra.mxu0 %v483
    %1274 = vmatprep.subr.mxu0 0.0
    %1275 = vmatpush1.msra.mxu0 %v486
    %1276 = vmatprep.subr.mxu0 0.0
    %1277 = vmatpush1.msra.mxu0 %v489
    %1278 = vmatprep.subr.mxu0 0.0
    %1279 = vmatpush1.msra.mxu0 %v492
    %1280 = vmatprep.subr.mxu0 0.0
    %1281 = vmatpush1.msra.mxu0 %v495
    %1282 = vmatprep.subr.mxu0 0.0
    %1283 = vmatpush1.msra.mxu0 %v498
    %1284 = vmatprep.subr.mxu0 0.0
    %1285 = vmatpush1.msra.mxu0 %v501
    %1286 = vmatprep.subr.mxu0 0.0
    %1287 = vmatpush1.msra.mxu0 %v504
    %1288 = vmatprep.subr.mxu0 0.0
    %1289 = vmatpush1.msra.mxu0 %v507
    %1290 = vmatprep.subr.mxu0 0.0
    %1291 = vmatpush1.msra.mxu0 %v510
    %1292 = vmatprep.subr.mxu0 0.0
    %1293 = vmatpush1.msra.mxu0 %v513
    %1294 = vmatprep.subr.mxu0 0.0
    %1295 = vmatpush1.msra.mxu0 %v516
    %1296 = vmatprep.subr.mxu0 0.0
    %1297 = vmatpush1.msra.mxu0 0.0
    %1298 = vmatprep.subr.mxu0 0.0
    %1299 = vmatpush1.msra.mxu0 0.0
    %1300 = vmatprep.subr.mxu0 0.0
    %1301 = vmatpush1.msra.mxu0 0.0
    %1302 = vmatprep.subr.mxu0 0.0
    %1303 = vmatpush1.msra.mxu0 0.0
    %1304 = vmatprep.subr.mxu0 0.0
    %1305 = vmatpush1.msra.mxu0 0.0
    %1306 = vmatprep.subr.mxu0 0.0
    %1307 = vmatpush1.msra.mxu0 0.0
    %1308 = vmatprep.subr.mxu0 0.0
    %1309 = vmatpush1.msra.mxu0 0.0
    %1310 = vmatprep.subr.mxu0 0.0
    %1311 = vmatpush1.msra.mxu0 0.0
    %1312 = vmatprep.subr.mxu0 0.0
    %1313 = vmatpush1.msra.mxu0 0.0
    %1314 = vmatprep.subr.mxu0 0.0
    %1315 = vmatpush1.msra.mxu0 0.0
    %1316 = vmatprep.subr.mxu0 0.0
    %1317 = vmatpush1.msra.mxu0 0.0
    %1318 = vmatprep.subr.mxu0 0.0
    %1319 = vmatpush1.msra.mxu0 0.0
    %1320 = vmatprep.subr.mxu0 0.0
    %1321 = vmatpush1.msra.mxu0 0.0
    %1322 = vmatprep.subr.mxu0 0.0
    %1323 = vmatpush1.msra.mxu0 0.0
    %1324 = vmatprep.subr.mxu0 0.0
    %1325 = vmatpush1.msra.mxu0 0.0
    %1326 = vmatprep.subr.mxu0 0.0
    %1327 = vmatpush1.msra.mxu0 0.0
    %1328 = vmatprep.mubr.f32.mxu0 0.0
    %1329 = vmatmul.mubr.f32.gmra.mrb[0].mxu0 %v1186
    %v1330 = vpop.f32.mrb[0].mxu0
    %v1331 = vadd.f32 0.0, %v1330
    %v1332 = vpop.f32.mrb[0].mxu0
    %1333 = vdwg.mxu0
    %v1334 = vadd.f32 %v1190, %v1260
    %v1335 = vadd.f32 %v1191, %v1262
    %v1336 = vxor.u32 %v1334, 2147483648
    %v1337 = vxor.u32 %v1335, 2147483648
    %v1338 = vmul.f32 %v1336, 1.442695
    %v1339 = vpow.pop %v1338
    %v1340 = vmul.f32 %v1337, 1.442695
    %v1341 = vpow.pop %v1340
    %v1342 = vadd.f32 %v1339, 1.0
    %v1343 = vadd.f32 %v1341, 1.0
    %v1344 = vrcp.pop %v1342
    %v1345 = vmul.f32 1.0, %v1344
    %v1346 = vrcp.pop %v1343
    %v1347 = vmul.f32 1.0, %v1346
    %v1348 = vadd.f32 %v1331, %v460
    %v1349 = vmul.f32 %v1345, %v1348
    %v1350 = vadd.f32 %v1192, %v1349
    %v1351 = vtanh.pop %v1350
    %v1352 = vsub.f32 1.0, %v1347
    %v1353 = vmul.f32 %v1352, %v1351
    %v1354 = vmul.f32 %v1347, %v1186
    %v1355 = vadd.f32 %v1353, %v1354
    %s1356 = smul.u32 5, 3
    %s1357 = smul.addr %s1356, 8
    %s1358 = scalar_lea.vmem [#allocation2], %s1357
    %v1359 = vld [vmem:[%s1358] sm:$0xff]
    %v1360 = vld [vmem:[%s1358 + $0x8] sm:$0xff]
    %v1361 = vld [vmem:[%s1358 + $0x10] sm:$0xff]
    %1362 = vmatprep.subr.mxu0 %v470
    %1363 = vmatpush1.msra.mxu0 %v469
    %1364 = vmatprep.subr.mxu0 %v473
    %1365 = vmatpush1.msra.mxu0 %v472
    %1366 = vmatprep.subr.mxu0 %v476
    %1367 = vmatpush1.msra.mxu0 %v475
    %1368 = vmatprep.subr.mxu0 %v479
    %1369 = vmatpush1.msra.mxu0 %v478
    %1370 = vmatprep.subr.mxu0 %v482
    %1371 = vmatpush1.msra.mxu0 %v481
    %1372 = vmatprep.subr.mxu0 %v485
    %1373 = vmatpush1.msra.mxu0 %v484
    %1374 = vmatprep.subr.mxu0 %v488
    %1375 = vmatpush1.msra.mxu0 %v487
    %1376 = vmatprep.subr.mxu0 %v491
    %1377 = vmatpush1.msra.mxu0 %v490
    %1378 = vmatprep.subr.mxu0 %v494
    %1379 = vmatpush1.msra.mxu0 %v493
    %1380 = vmatprep.subr.mxu0 %v497
    %1381 = vmatpush1.msra.mxu0 %v496
    %1382 = vmatprep.subr.mxu0 %v500
    %1383 = vmatpush1.msra.mxu0 %v499
    %1384 = vmatprep.subr.mxu0 %v503
    %1385 = vmatpush1.msra.mxu0 %v502
    %1386 = vmatprep.subr.mxu0 %v506
    %1387 = vmatpush1.msra.mxu0 %v505
    %1388 = vmatprep.subr.mxu0 %v509
    %1389 = vmatpush1.msra.mxu0 %v508
    %1390 = vmatprep.subr.mxu0 %v512
    %1391 = vmatpush1.msra.mxu0 %v511
    %1392 = vmatprep.subr.mxu0 %v515
    %1393 = vmatpush1.msra.mxu0 %v514
    %1394 = vmatprep.subr.mxu0 0.0
    %1395 = vmatpush1.msra.mxu0 0.0
    %1396 = vmatprep.subr.mxu0 0.0
    %1397 = vmatpush1.msra.mxu0 0.0
    %1398 = vmatprep.subr.mxu0 0.0
    %1399 = vmatpush1.msra.mxu0 0.0
    %1400 = vmatprep.subr.mxu0 0.0
    %1401 = vmatpush1.msra.mxu0 0.0
    %1402 = vmatprep.subr.mxu0 0.0
    %1403 = vmatpush1.msra.mxu0 0.0
    %1404 = vmatprep.subr.mxu0 0.0
    %1405 = vmatpush1.msra.mxu0 0.0
    %1406 = vmatprep.subr.mxu0 0.0
    %1407 = vmatpush1.msra.mxu0 0.0
    %1408 = vmatprep.subr.mxu0 0.0
    %1409 = vmatpush1.msra.mxu0 0.0
    %1410 = vmatprep.subr.mxu0 0.0
    %1411 = vmatpush1.msra.mxu0 0.0
    %1412 = vmatprep.subr.mxu0 0.0
    %1413 = vmatpush1.msra.mxu0 0.0
    %1414 = vmatprep.subr.mxu0 0.0
    %1415 = vmatpush1.msra.mxu0 0.0
    %1416 = vmatprep.subr.mxu0 0.0
    %1417 = vmatpush1.msra.mxu0 0.0
    %1418 = vmatprep.subr.mxu0 0.0
    %1419 = vmatpush1.msra.mxu0 0.0
    %1420 = vmatprep.subr.mxu0 0.0
    %1421 = vmatpush1.msra.mxu0 0.0
    %1422 = vmatprep.subr.mxu0 0.0
    %1423 = vmatpush1.msra.mxu0 0.0
    %1424 = vmatprep.subr.mxu0 0.0
    %1425 = vmatpush1.msra.mxu0 0.0
    %1426 = vmatprep.mubr.f32.mxu0 0.0
    %1427 = vmatmul.mubr.f32.gmra.mrb[0].mxu0 %v1355
    %v1428 = vpop.f32.mrb[0].mxu0
    %v1429 = vadd.f32 0.0, %v1428
    %v1430 = vpop.f32.mrb[0].mxu0
    %v1431 = vadd.f32 0.0, %v1430
    %1432 = vdwg.mxu0
    %1433 = vmatprep.subr.mxu0 0.0
    %1434 = vmatpush1.msra.mxu0 %v471
    %1435 = vmatprep.subr.mxu0 0.0
    %1436 = vmatpush1.msra.mxu0 %v474
    %1437 = vmatprep.subr.mxu0 0.0
    %1438 = vmatpush1.msra.mxu0 %v477
    %1439 = vmatprep.subr.mxu0 0.0
    %1440 = vmatpush1.msra.mxu0 %v480
    %1441 = vmatprep.subr.mxu0 0.0
    %1442 = vmatpush1.msra.mxu0 %v483
    %1443 = vmatprep.subr.mxu0 0.0
    %1444 = vmatpush1.msra.mxu0 %v486
    %1445 = vmatprep.subr.mxu0 0.0
    %1446 = vmatpush1.msra.mxu0 %v489
    %1447 = vmatprep.subr.mxu0 0.0
    %1448 = vmatpush1.msra.mxu0 %v492
    %1449 = vmatprep.subr.mxu0 0.0
    %1450 = vmatpush1.msra.mxu0 %v495
    %1451 = vmatprep.subr.mxu0 0.0
    %1452 = vmatpush1.msra.mxu0 %v498
    %1453 = vmatprep.subr.mxu0 0.0
    %1454 = vmatpush1.msra.mxu0 %v501
    %1455 = vmatprep.subr.mxu0 0.0
    %1456 = vmatpush1.msra.mxu0 %v504
    %1457 = vmatprep.subr.mxu0 0.0
    %1458 = vmatpush1.msra.mxu0 %v507
    %1459 = vmatprep.subr.mxu0 0.0
    %1460 = vmatpush1.msra.mxu0 %v510
    %1461 = vmatprep.subr.mxu0 0.0
    %1462 = vmatpush1.msra.mxu0 %v513
    %1463 = vmatprep.subr.mxu0 0.0
    %1464 = vmatpush1.msra.mxu0 %v516
    %1465 = vmatprep.subr.mxu0 0.0
    %1466 = vmatpush1.msra.mxu0 0.0
    %1467 = vmatprep.subr.mxu0 0.0
    %1468 = vmatpush1.msra.mxu0 0.0
    %1469 = vmatprep.subr.mxu0 0.0
    %1470 = vmatpush1.msra.mxu0 0.0
    %1471 = vmatprep.subr.mxu0 0.0
    %1472 = vmatpush1.msra.mxu0 0.0
    %1473 = vmatprep.subr.mxu0 0.0
    %1474 = vmatpush1.msra.mxu0 0.0
    %1475 = vmatprep.subr.mxu0 0.0
    %1476 = vmatpush1.msra.mxu0 0.0
    %1477 = vmatprep.subr.mxu0 0.0
    %1478 = vmatpush1.msra.mxu0 0.0
    %1479 = vmatprep.subr.mxu0 0.0
    %1480 = vmatpush1.msra.mxu0 0.0
    %1481 = vmatprep.subr.mxu0 0.0
    %1482 = vmatpush1.msra.mxu0 0.0
    %1483 = vmatprep.subr.mxu0 0.0
    %1484 = vmatpush1.msra.mxu0 0.0
    %1485 = vmatprep.subr.mxu0 0.0
    %1486 = vmatpush1.msra.mxu0 0.0
    %1487 = vmatprep.subr.mxu0 0.0
    %1488 = vmatpush1.msra.mxu0 0.0
    %1489 = vmatprep.subr.mxu0 0.0
    %1490 = vmatpush1.msra.mxu0 0.0
    %1491 = vmatprep.subr.mxu0 0.0
    %1492 = vmatpush1.msra.mxu0 0.0
    %1493 = vmatprep.subr.mxu0 0.0
    %1494 = vmatpush1.msra.mxu0 0.0
    %1495 = vmatprep.subr.mxu0 0.0
    %1496 = vmatpush1.msra.mxu0 0.0
    %1497 = vmatprep.mubr.f32.mxu0 0.0
    %1498 = vmatmul.mubr.f32.gmra.mrb[0].mxu0 %v1355
    %v1499 = vpop.f32.mrb[0].mxu0
    %v1500 = vadd.f32 0.0, %v1499
    %v1501 = vpop.f32.mrb[0].mxu0
    %1502 = vdwg.mxu0
    %v1503 = vadd.f32 %v1359, %v1429
    %v1504 = vadd.f32 %v1360, %v1431
    %v1505 = vxor.u32 %v1503, 2147483648
    %v1506 = vxor.u32 %v1504, 2147483648
    %v1507 = vmul.f32 %v1505, 1.442695
    %v1508 = vpow.pop %v1507
    %v1509 = vmul.f32 %v1506, 1.442695
    %v1510 = vpow.pop %v1509
    %v1511 = vadd.f32 %v1508, 1.0
    %v1512 = vadd.f32 %v1510, 1.0
    %v1513 = vrcp.pop %v1511
    %v1514 = vmul.f32 1.0, %v1513
    %v1515 = vrcp.pop %v1512
    %v1516 = vmul.f32 1.0, %v1515
    %v1517 = vadd.f32 %v1500, %v460
    %v1518 = vmul.f32 %v1514, %v1517
    %v1519 = vadd.f32 %v1361, %v1518
    %v1520 = vtanh.pop %v1519
    %v1521 = vsub.f32 1.0, %v1516
    %v1522 = vmul.f32 %v1521, %v1520
    %v1523 = vmul.f32 %v1516, %v1355
    %v1524 = vadd.f32 %v1522, %v1523
    %s1525 = smul.u32 6, 3
    %s1526 = smul.addr %s1525, 8
    %s1527 = scalar_lea.vmem [#allocation2], %s1526
    %v1528 = vld [vmem:[%s1527] sm:$0xff]
    %v1529 = vld [vmem:[%s1527 + $0x8] sm:$0xff]
    %v1530 = vld [vmem:[%s1527 + $0x10] sm:$0xff]
    %1531 = vmatprep.subr.mxu0 %v470
    %1532 = vmatpush1.msra.mxu0 %v469
    %1533 = vmatprep.subr.mxu0 %v473
    %1534 = vmatpush1.msra.mxu0 %v472
    %1535 = vmatprep.subr.mxu0 %v476
    %1536 = vmatpush1.msra.mxu0 %v475
    %1537 = vmatprep.subr.mxu0 %v479
    %1538 = vmatpush1.msra.mxu0 %v478
    %1539 = vmatprep.subr.mxu0 %v482
    %1540 = vmatpush1.msra.mxu0 %v481
    %1541 = vmatprep.subr.mxu0 %v485
    %1542 = vmatpush1.msra.mxu0 %v484
    %1543 = vmatprep.subr.mxu0 %v488
    %1544 = vmatpush1.msra.mxu0 %v487
    %1545 = vmatprep.subr.mxu0 %v491
    %1546 = vmatpush1.msra.mxu0 %v490
    %1547 = vmatprep.subr.mxu0 %v494
    %1548 = vmatpush1.msra.mxu0 %v493
    %1549 = vmatprep.subr.mxu0 %v497
    %1550 = vmatpush1.msra.mxu0 %v496
    %1551 = vmatprep.subr.mxu0 %v500
    %1552 = vmatpush1.msra.mxu0 %v499
    %1553 = vmatprep.subr.mxu0 %v503
    %1554 = vmatpush1.msra.mxu0 %v502
    %1555 = vmatprep.subr.mxu0 %v506
    %1556 = vmatpush1.msra.mxu0 %v505
    %1557 = vmatprep.subr.mxu0 %v509
    %1558 = vmatpush1.msra.mxu0 %v508
    %1559 = vmatprep.subr.mxu0 %v512
    %1560 = vmatpush1.msra.mxu0 %v511
    %1561 = vmatprep.subr.mxu0 %v515
    %1562 = vmatpush1.msra.mxu0 %v514
    %1563 = vmatprep.subr.mxu0 0.0
    %1564 = vmatpush1.msra.mxu0 0.0
    %1565 = vmatprep.subr.mxu0 0.0
    %1566 = vmatpush1.msra.mxu0 0.0
    %1567 = vmatprep.subr.mxu0 0.0
    %1568 = vmatpush1.msra.mxu0 0.0
    %1569 = vmatprep.subr.mxu0 0.0
    %1570 = vmatpush1.msra.mxu0 0.0
    %1571 = vmatprep.subr.mxu0 0.0
    %1572 = vmatpush1.msra.mxu0 0.0
    %1573 = vmatprep.subr.mxu0 0.0
    %1574 = vmatpush1.msra.mxu0 0.0
    %1575 = vmatprep.subr.mxu0 0.0
    %1576 = vmatpush1.msra.mxu0 0.0
    %1577 = vmatprep.subr.mxu0 0.0
    %1578 = vmatpush1.msra.mxu0 0.0
    %1579 = vmatprep.subr.mxu0 0.0
    %1580 = vmatpush1.msra.mxu0 0.0
    %1581 = vmatprep.subr.mxu0 0.0
    %1582 = vmatpush1.msra.mxu0 0.0
    %1583 = vmatprep.subr.mxu0 0.0
    %1584 = vmatpush1.msra.mxu0 0.0
    %1585 = vmatprep.subr.mxu0 0.0
    %1586 = vmatpush1.msra.mxu0 0.0
    %1587 = vmatprep.subr.mxu0 0.0
    %1588 = vmatpush1.msra.mxu0 0.0
    %1589 = vmatprep.subr.mxu0 0.0
    %1590 = vmatpush1.msra.mxu0 0.0
    %1591 = vmatprep.subr.mxu0 0.0
    %1592 = vmatpush1.msra.mxu0 0.0
    %1593 = vmatprep.subr.mxu0 0.0
    %1594 = vmatpush1.msra.mxu0 0.0
    %1595 = vmatprep.mubr.f32.mxu0 0.0
    %1596 = vmatmul.mubr.f32.gmra.mrb[0].mxu0 %v1524
    %v1597 = vpop.f32.mrb[0].mxu0
    %v1598 = vadd.f32 0.0, %v1597
    %v1599 = vpop.f32.mrb[0].mxu0
    %v1600 = vadd.f32 0.0, %v1599
    %1601 = vdwg.mxu0
    %1602 = vmatprep.subr.mxu0 0.0
    %1603 = vmatpush1.msra.mxu0 %v471
    %1604 = vmatprep.subr.mxu0 0.0
    %1605 = vmatpush1.msra.mxu0 %v474
    %1606 = vmatprep.subr.mxu0 0.0
    %1607 = vmatpush1.msra.mxu0 %v477
    %1608 = vmatprep.subr.mxu0 0.0
    %1609 = vmatpush1.msra.mxu0 %v480
    %1610 = vmatprep.subr.mxu0 0.0
    %1611 = vmatpush1.msra.mxu0 %v483
    %1612 = vmatprep.subr.mxu0 0.0
    %1613 = vmatpush1.msra.mxu0 %v486
    %1614 = vmatprep.subr.mxu0 0.0
    %1615 = vmatpush1.msra.mxu0 %v489
    %1616 = vmatprep.subr.mxu0 0.0
    %1617 = vmatpush1.msra.mxu0 %v492
    %1618 = vmatprep.subr.mxu0 0.0
    %1619 = vmatpush1.msra.mxu0 %v495
    %1620 = vmatprep.subr.mxu0 0.0
    %1621 = vmatpush1.msra.mxu0 %v498
    %1622 = vmatprep.subr.mxu0 0.0
    %1623 = vmatpush1.msra.mxu0 %v501
    %1624 = vmatprep.subr.mxu0 0.0
    %1625 = vmatpush1.msra.mxu0 %v504
    %1626 = vmatprep.subr.mxu0 0.0
    %1627 = vmatpush1.msra.mxu0 %v507
    %1628 = vmatprep.subr.mxu0 0.0
    %1629 = vmatpush1.msra.mxu0 %v510
    %1630 = vmatprep.subr.mxu0 0.0
    %1631 = vmatpush1.msra.mxu0 %v513
    %1632 = vmatprep.subr.mxu0 0.0
    %1633 = vmatpush1.msra.mxu0 %v516
    %1634 = vmatprep.subr.mxu0 0.0
    %1635 = vmatpush1.msra.mxu0 0.0
    %1636 = vmatprep.subr.mxu0 0.0
    %1637 = vmatpush1.msra.mxu0 0.0
    %1638 = vmatprep.subr.mxu0 0.0
    %1639 = vmatpush1.msra.mxu0 0.0
    %1640 = vmatprep.subr.mxu0 0.0
    %1641 = vmatpush1.msra.mxu0 0.0
    %1642 = vmatprep.subr.mxu0 0.0
    %1643 = vmatpush1.msra.mxu0 0.0
    %1644 = vmatprep.subr.mxu0 0.0
    %1645 = vmatpush1.msra.mxu0 0.0
    %1646 = vmatprep.subr.mxu0 0.0
    %1647 = vmatpush1.msra.mxu0 0.0
    %1648 = vmatprep.subr.mxu0 0.0
    %1649 = vmatpush1.msra.mxu0 0.0
    %1650 = vmatprep.subr.mxu0 0.0
    %1651 = vmatpush1.msra.mxu0 0.0
    %1652 = vmatprep.subr.mxu0 0.0
    %1653 = vmatpush1.msra.mxu0 0.0
    %1654 = vmatprep.subr.mxu0 0.0
    %1655 = vmatpush1.msra.mxu0 0.0
    %1656 = vmatprep.subr.mxu0 0.0
    %1657 = vmatpush1.msra.mxu0 0.0
    %1658 = vmatprep.subr.mxu0 0.0
    %1659 = vmatpush1.msra.mxu0 0.0
    %1660 = vmatprep.subr.mxu0 0.0
    %1661 = vmatpush1.msra.mxu0 0.0
    %1662 = vmatprep.subr.mxu0 0.0
    %1663 = vmatpush1.msra.mxu0 0.0
    %1664 = vmatprep.subr.mxu0 0.0
    %1665 = vmatpush1.msra.mxu0 0.0
    %1666 = vmatprep.mubr.f32.mxu0 0.0
    %1667 = vmatmul.mubr.f32.gmra.mrb[0].mxu0 %v1524
    %v1668 = vpop.f32.mrb[0].mxu0
    %v1669 = vadd.f32 0.0, %v1668
    %v1670 = vpop.f32.mrb[0].mxu0
    %1671 = vdwg.mxu0
    %v1672 = vadd.f32 %v1528, %v1598
    %v1673 = vadd.f32 %v1529, %v1600
    %v1674 = vxor.u32 %v1672, 2147483648
    %v1675 = vxor.u32 %v1673, 2147483648
    %v1676 = vmul.f32 %v1674, 1.442695
    %v1677 = vpow.pop %v1676
    %v1678 = vmul.f32 %v1675, 1.442695
    %v1679 = vpow.pop %v1678
    %v1680 = vadd.f32 %v1677, 1.0
    %v1681 = vadd.f32 %v1679, 1.0
    %v1682 = vrcp.pop %v1680
    %v1683 = vmul.f32 1.0, %v1682
    %v1684 = vrcp.pop %v1681
    %v1685 = vmul.f32 1.0, %v1684
    %v1686 = vadd.f32 %v1669, %v460
    %v1687 = vmul.f32 %v1683, %v1686
    %v1688 = vadd.f32 %v1530, %v1687
    %v1689 = vtanh.pop %v1688
    %v1690 = vsub.f32 1.0, %v1685
    %v1691 = vmul.f32 %v1690, %v1689
    %v1692 = vmul.f32 %v1685, %v1524
    %v1693 = vadd.f32 %v1691, %v1692
    %s1694 = smul.u32 7, 3
    %s1695 = smul.addr %s1694, 8
    %s1696 = scalar_lea.vmem [#allocation2], %s1695
    %v1697 = vld [vmem:[%s1696] sm:$0xff]
    %v1698 = vld [vmem:[%s1696 + $0x8] sm:$0xff]
    %v1699 = vld [vmem:[%s1696 + $0x10] sm:$0xff]
    %1700 = vmatprep.subr.mxu0 %v470
    %1701 = vmatpush1.msra.mxu0 %v469
    %1702 = vmatprep.subr.mxu0 %v473
    %1703 = vmatpush1.msra.mxu0 %v472
    %1704 = vmatprep.subr.mxu0 %v476
    %1705 = vmatpush1.msra.mxu0 %v475
    %1706 = vmatprep.subr.mxu0 %v479
    %1707 = vmatpush1.msra.mxu0 %v478
    %1708 = vmatprep.subr.mxu0 %v482
    %1709 = vmatpush1.msra.mxu0 %v481
    %1710 = vmatprep.subr.mxu0 %v485
    %1711 = vmatpush1.msra.mxu0 %v484
    %1712 = vmatprep.subr.mxu0 %v488
    %1713 = vmatpush1.msra.mxu0 %v487
    %1714 = vmatprep.subr.mxu0 %v491
    %1715 = vmatpush1.msra.mxu0 %v490
    %1716 = vmatprep.subr.mxu0 %v494
    %1717 = vmatpush1.msra.mxu0 %v493
    %1718 = vmatprep.subr.mxu0 %v497
    %1719 = vmatpush1.msra.mxu0 %v496
    %1720 = vmatprep.subr.mxu0 %v500
    %1721 = vmatpush1.msra.mxu0 %v499
    %1722 = vmatprep.subr.mxu0 %v503
    %1723 = vmatpush1.msra.mxu0 %v502
    %1724 = vmatprep.subr.mxu0 %v506
    %1725 = vmatpush1.msra.mxu0 %v505
    %1726 = vmatprep.subr.mxu0 %v509
    %1727 = vmatpush1.msra.mxu0 %v508
    %1728 = vmatprep.subr.mxu0 %v512
    %1729 = vmatpush1.msra.mxu0 %v511
    %1730 = vmatprep.subr.mxu0 %v515
    %1731 = vmatpush1.msra.mxu0 %v514
    %1732 = vmatprep.subr.mxu0 0.0
    %1733 = vmatpush1.msra.mxu0 0.0
    %1734 = vmatprep.subr.mxu0 0.0
    %1735 = vmatpush1.msra.mxu0 0.0
    %1736 = vmatprep.subr.mxu0 0.0
    %1737 = vmatpush1.msra.mxu0 0.0
    %1738 = vmatprep.subr.mxu0 0.0
    %1739 = vmatpush1.msra.mxu0 0.0
    %1740 = vmatprep.subr.mxu0 0.0
    %1741 = vmatpush1.msra.mxu0 0.0
    %1742 = vmatprep.subr.mxu0 0.0
    %1743 = vmatpush1.msra.mxu0 0.0
    %1744 = vmatprep.subr.mxu0 0.0
    %1745 = vmatpush1.msra.mxu0 0.0
    %1746 = vmatprep.subr.mxu0 0.0
    %1747 = vmatpush1.msra.mxu0 0.0
    %1748 = vmatprep.subr.mxu0 0.0
    %1749 = vmatpush1.msra.mxu0 0.0
    %1750 = vmatprep.subr.mxu0 0.0
    %1751 = vmatpush1.msra.mxu0 0.0
    %1752 = vmatprep.subr.mxu0 0.0
    %1753 = vmatpush1.msra.mxu0 0.0
    %1754 = vmatprep.subr.mxu0 0.0
    %1755 = vmatpush1.msra.mxu0 0.0
    %1756 = vmatprep.subr.mxu0 0.0
    %1757 = vmatpush1.msra.mxu0 0.0
    %1758 = vmatprep.subr.mxu0 0.0
    %1759 = vmatpush1.msra.mxu0 0.0
    %1760 = vmatprep.subr.mxu0 0.0
    %1761 = vmatpush1.msra.mxu0 0.0
    %1762 = vmatprep.subr.mxu0 0.0
    %1763 = vmatpush1.msra.mxu0 0.0
    %1764 = vmatprep.mubr.f32.mxu0 0.0
    %1765 = vmatmul.mubr.f32.gmra.mrb[0].mxu0 %v1693
    %v1766 = vpop.f32.mrb[0].mxu0
    %v1767 = vadd.f32 0.0, %v1766
    %v1768 = vpop.f32.mrb[0].mxu0
    %v1769 = vadd.f32 0.0, %v1768
    %1770 = vdwg.mxu0
    %1771 = vmatprep.subr.mxu0 0.0
    %1772 = vmatpush1.msra.mxu0 %v471
    %1773 = vmatprep.subr.mxu0 0.0
    %1774 = vmatpush1.msra.mxu0 %v474
    %1775 = vmatprep.subr.mxu0 0.0
    %1776 = vmatpush1.msra.mxu0 %v477
    %1777 = vmatprep.subr.mxu0 0.0
    %1778 = vmatpush1.msra.mxu0 %v480
    %1779 = vmatprep.subr.mxu0 0.0
    %1780 = vmatpush1.msra.mxu0 %v483
    %1781 = vmatprep.subr.mxu0 0.0
    %1782 = vmatpush1.msra.mxu0 %v486
    %1783 = vmatprep.subr.mxu0 0.0
    %1784 = vmatpush1.msra.mxu0 %v489
    %1785 = vmatprep.subr.mxu0 0.0
    %1786 = vmatpush1.msra.mxu0 %v492
    %1787 = vmatprep.subr.mxu0 0.0
    %1788 = vmatpush1.msra.mxu0 %v495
    %1789 = vmatprep.subr.mxu0 0.0
    %1790 = vmatpush1.msra.mxu0 %v498
    %1791 = vmatprep.subr.mxu0 0.0
    %1792 = vmatpush1.msra.mxu0 %v501
    %1793 = vmatprep.subr.mxu0 0.0
    %1794 = vmatpush1.msra.mxu0 %v504
    %1795 = vmatprep.subr.mxu0 0.0
    %1796 = vmatpush1.msra.mxu0 %v507
    %1797 = vmatprep.subr.mxu0 0.0
    %1798 = vmatpush1.msra.mxu0 %v510
    %1799 = vmatprep.subr.mxu0 0.0
    %1800 = vmatpush1.msra.mxu0 %v513
    %1801 = vmatprep.subr.mxu0 0.0
    %1802 = vmatpush1.msra.mxu0 %v516
    %1803 = vmatprep.subr.mxu0 0.0
    %1804 = vmatpush1.msra.mxu0 0.0
    %1805 = vmatprep.subr.mxu0 0.0
    %1806 = vmatpush1.msra.mxu0 0.0
    %1807 = vmatprep.subr.mxu0 0.0
    %1808 = vmatpush1.msra.mxu0 0.0
    %1809 = vmatprep.subr.mxu0 0.0
    %1810 = vmatpush1.msra.mxu0 0.0
    %1811 = vmatprep.subr.mxu0 0.0
    %1812 = vmatpush1.msra.mxu0 0.0
    %1813 = vmatprep.subr.mxu0 0.0
    %1814 = vmatpush1.msra.mxu0 0.0
    %1815 = vmatprep.subr.mxu0 0.0
    %1816 = vmatpush1.msra.mxu0 0.0
    %1817 = vmatprep.subr.mxu0 0.0
    %1818 = vmatpush1.msra.mxu0 0.0
    %1819 = vmatprep.subr.mxu0 0.0
    %1820 = vmatpush1.msra.mxu0 0.0
    %1821 = vmatprep.subr.mxu0 0.0
    %1822 = vmatpush1.msra.mxu0 0.0
    %1823 = vmatprep.subr.mxu0 0.0
    %1824 = vmatpush1.msra.mxu0 0.0
    %1825 = vmatprep.subr.mxu0 0.0
    %1826 = vmatpush1.msra.mxu0 0.0
    %1827 = vmatprep.subr.mxu0 0.0
    %1828 = vmatpush1.msra.mxu0 0.0
    %1829 = vmatprep.subr.mxu0 0.0
    %1830 = vmatpush1.msra.mxu0 0.0
    %1831 = vmatprep.subr.mxu0 0.0
    %1832 = vmatpush1.msra.mxu0 0.0
    %1833 = vmatprep.subr.mxu0 0.0
    %1834 = vmatpush1.msra.mxu0 0.0
    %1835 = vmatprep.mubr.f32.mxu0 0.0
    %1836 = vmatmul.mubr.f32.gmra.mrb[0].mxu0 %v1693
    %v1837 = vpop.f32.mrb[0].mxu0
    %v1838 = vadd.f32 0.0, %v1837
    %v1839 = vpop.f32.mrb[0].mxu0
    %1840 = vdwg.mxu0
    %v1841 = vadd.f32 %v1697, %v1767
    %v1842 = vadd.f32 %v1698, %v1769
    %v1843 = vxor.u32 %v1841, 2147483648
    %v1844 = vxor.u32 %v1842, 2147483648
    %v1845 = vmul.f32 %v1843, 1.442695
    %v1846 = vpow.pop %v1845
    %v1847 = vmul.f32 %v1844, 1.442695
    %v1848 = vpow.pop %v1847
    %v1849 = vadd.f32 %v1846, 1.0
    %v1850 = vadd.f32 %v1848, 1.0
    %v1851 = vrcp.pop %v1849
    %v1852 = vmul.f32 1.0, %v1851
    %v1853 = vrcp.pop %v1850
    %v1854 = vmul.f32 1.0, %v1853
    %v1855 = vadd.f32 %v1838, %v460
    %v1856 = vmul.f32 %v1852, %v1855
    %v1857 = vadd.f32 %v1699, %v1856
    %v1858 = vtanh.pop %v1857
    %v1859 = vsub.f32 1.0, %v1854
    %v1860 = vmul.f32 %v1859, %v1858
    %v1861 = vmul.f32 %v1854, %v1693
    %v1862 = vadd.f32 %v1860, %v1861
    %1863 = vst [vmem:[#allocation11] sm:$0xff] %v1862
    // Predicated region
    $region46: #{tpu_custom_call.1} parent=1 // pred_check
      _
    $region47: #{tpu_custom_call.1} parent=1 // pred_check_branch
      %1865 = sbr.rel (0) target = $region49
    $region48: #{tpu_custom_call.1} parent=1 // pred_region
      %s1867 = ssub.s32 128, 128
      %1868 = vsyncadd [#allocation5], %s1867
      %s1870 = sshll.u32 [#allocation11], 4
      %s1871 = int_to_ptr.vmem [resolvable:$true] %s1870
      %1873 = dma.vmem_to_hbm [thread:$0]  %s1871, 128, %s6, [#allocation5]
    $region49: #{tpu_custom_call.1} parent=1 // pred_fallthru
      _
    // Predicated region
    $region50: #{tpu_custom_call.1} parent=1 // pred_check
      _
    $region51: #{tpu_custom_call.1} parent=1 // pred_check_branch
      %1875 = sbr.rel (0) target = $region53
    $region52: #{tpu_custom_call.1} parent=1 // pred_region
      %1876 = dma.done [#allocation5], 128
    $region53: #{tpu_custom_call.1} parent=1 // pred_fallthru
      _
    %1877 = vsyncpa [#allocation4], 1
    %1878 = vsyncpa [#allocation7], 1
    %1879 = vsyncpa [#allocation10], 1
    %1880 = vsyncpa [#allocation5], 1

</llo_original>
